<compile_context>
chip_gen: v7x
topology: tpu7x:2x2x1
jax: 0.10.0
libtpu: 0.0.40
codegen_flags: <defaults>
</compile_context>

<pallas_src>
import jax
import jax.numpy as jnp
from jax import lax
from jax.experimental import pallas as pl
from jax.experimental.pallas import tpu as pltpu

_LANE = 128
_SUBLANE = 8


def _round_up(x, m):
    return ((x + m - 1) // m) * m


def linear_ssm_kernel(x0_ref, u_ref, M_ref, Bc_ref, Cc_ref, Dt_ref, bias_ref,
                      y_ref, x_state, bu_ref, xh_ref):
    """One time-chunk: hoisted GEMMs + minimal serial recurrence.

    Block shapes:
      x0_ref   : (Bp, Sp2)        packed [x0_re | x0_im], zero-padded
      u_ref    : (Tc, Bp, IN)     time-major input chunk
      M_ref    : (Sp2, Sp2)       folded [[A_re^T, A_im^T], [-A_im^T, A_re^T]]
      Bc_ref   : (IN, Sp2)        [B_re^T | B_im^T]
      Cc_ref   : (Sp2, OUT)       [C_re^T ; -C_im^T]
      Dt_ref   : (IN, OUT)        D^T
      bias_ref : (1, OUT)
      y_ref    : (Tc, Bp, OUT)
      x_state  : VMEM (Bp, Sp2)       carried recurrent state (persists across chunks)
      bu_ref   : VMEM (Tc, Bp, Sp2)   precomputed B*u_t for this chunk
      xh_ref   : VMEM (Tc, Bp, Sp2)   state history x_{t+1} for this chunk
    """
    Tc, Bp, IN = u_ref.shape
    Sp2 = M_ref.shape[0]
    OUT = y_ref.shape[-1]
    acc_t = jnp.float32

    # Initialize the carried state from x0 on the very first time chunk.
    @pl.when(pl.program_id(0) == 0)
    def _():
        x_state[...] = x0_ref[...].astype(x_state.dtype)

    # ---- Hoisted input projection: one (Tc*Bp, IN) x (IN, Sp2) GEMM. --------
    u2 = u_ref[...].reshape(Tc * Bp, IN)
    bu_ref[...] = jnp.dot(u2, Bc_ref[...],
                          preferred_element_type=acc_t).reshape(Tc, Bp, Sp2)

    # ---- Serial recurrence: ONE (Bp, Sp2) x (Sp2, Sp2) matmul per step. -----
    M = M_ref[...]
    cdt = M.dtype  # compute dtype for matmul operands (f32 or bf16); carry stays f32

    def body(t, X):
        Xn = jnp.dot(X.astype(cdt), M, preferred_element_type=acc_t) + bu_ref[t]
        xh_ref[t] = Xn
        return Xn

    x_state[...] = lax.fori_loop(0, Tc, body, x_state[...],
                                 unroll=min(Tc, 8))

    # ---- Hoisted output projection: y = real(C x_{t+1}) + D u_t + bias. -----
    u2b = u_ref[...].reshape(Tc * Bp, IN)   # re-read; keeps u out of the loop's live set
    y_base = (jnp.dot(u2b, Dt_ref[...], preferred_element_type=acc_t)
              + bias_ref[...].astype(acc_t))
    xh2 = xh_ref[...].reshape(Tc * Bp, Sp2)
    y2 = jnp.dot(xh2.astype(cdt), Cc_ref[...], preferred_element_type=acc_t)
    y_ref[...] = (y2 + y_base).reshape(Tc, Bp, OUT).astype(y_ref.dtype)


def linear_ssm_forward(u, params, x0=None, *, time_chunk=None,
                       weight_dtype=jnp.float32,
                       vmem_budget_bytes=32 * 1024 * 1024):
    """u: (B, T, IN) ; x0: optional complex (B, S). Returns (B, T, OUT) float32.

    weight_dtype=jnp.bfloat16 is recommended on v6e/v7x (MXU peak, half the
    weight VMEM); the default float32 keeps exact parity with the f32
    reference. The recurrent state carry and all accumulation stay float32.
    """
    Bb, T, IN = u.shape
    OUT, S = params["C_re"].shape
    S2 = 2 * S

    Sp2 = _round_up(S2, _LANE)    # lane-pad packed complex state dim
    Bp = _round_up(Bb, _SUBLANE)  # sublane-pad batch (f32: 8 rows)

    f32 = jnp.float32
    A_re, A_im = params["A_re"].astype(f32), params["A_im"].astype(f32)
    B_re, B_im = params["B_re"].astype(f32), params["B_im"].astype(f32)
    C_re, C_im = params["C_re"].astype(f32), params["C_im"].astype(f32)
    D_w, bias = params["D_w"].astype(f32), params["bias"].astype(f32)

    # Fold the complex recurrence / projections into real block matrices in
    # x @ W orientation, zero-padded so padded state columns stay exactly zero.
    M = jnp.zeros((Sp2, Sp2), f32)
    M = M.at[:S, :S].set(A_re.T).at[:S, S:S2].set(A_im.T)
    M = M.at[S:S2, :S].set(-A_im.T).at[S:S2, S:S2].set(A_re.T)

    Bc = jnp.zeros((IN, Sp2), f32)
    Bc = Bc.at[:, :S].set(B_re.T).at[:, S:S2].set(B_im.T)

    Cc = jnp.zeros((Sp2, OUT), f32)
    Cc = Cc.at[:S, :].set(C_re.T).at[S:S2, :].set(-C_im.T)

    Dt = D_w.T                      # (IN, OUT)
    bias2 = bias.reshape(1, OUT)

    X0 = jnp.zeros((Bp, Sp2), f32)
    if x0 is not None:
        X0 = X0.at[:Bb, :S].set(jnp.real(x0).astype(f32))
        X0 = X0.at[:Bb, S:S2].set(jnp.imag(x0).astype(f32))

    # ---- Time chunking sized for a VMEM budget valid on v5e/v6e/v7x. --------
    itemsize_w = jnp.dtype(weight_dtype).itemsize
    fixed_bytes = ((Sp2 * Sp2 + IN * Sp2 + Sp2 * OUT + IN * OUT) * itemsize_w
                   + (OUT + 2 * Bp * Sp2) * 4)              # weights + x0 + state
    per_t_bytes = ((Bp * IN * itemsize_w + Bp * OUT * 4) * 2  # dbl-buffered u / y rows
                   + 2 * Bp * Sp2 * 4)                        # BU + history scratch rows
    if time_chunk is None:
        time_chunk = max((vmem_budget_bytes - 2 * fixed_bytes) // per_t_bytes, _SUBLANE)
        time_chunk = min(time_chunk, 1024)                    # bound per-step latency
    Tc = int(max(_SUBLANE,
                 min(_round_up(time_chunk, _SUBLANE), _round_up(T, _SUBLANE))))
    Tp = _round_up(T, Tc)
    n_chunks = Tp // Tc

    # Time-major, zero-padded (time & batch) input.
    u_tm = jnp.transpose(u, (1, 0, 2)).astype(f32)
    u_tm = jnp.pad(u_tm, ((0, Tp - T), (0, Bp - Bb), (0, 0)))

    wd = weight_dtype
    M, Bc, Cc, Dt, u_tm = (a.astype(wd) for a in (M, Bc, Cc, Dt, u_tm))

    vmem_limit = int(min(max(2 * fixed_bytes + per_t_bytes * Tc + (4 << 20),
                             16 << 20),
                         48 << 20))

    grid_spec = pltpu.PrefetchScalarGridSpec(
        num_scalar_prefetch=0,
        grid=(n_chunks,),
        in_specs=[
            pl.BlockSpec((Bp, Sp2), lambda t: (0, 0)),         # X0
            pl.BlockSpec((Tc, Bp, IN), lambda t: (t, 0, 0)),   # u chunk
            pl.BlockSpec((Sp2, Sp2), lambda t: (0, 0)),        # M
            pl.BlockSpec((IN, Sp2), lambda t: (0, 0)),         # Bc
            pl.BlockSpec((Sp2, OUT), lambda t: (0, 0)),        # Cc
            pl.BlockSpec((IN, OUT), lambda t: (0, 0)),         # Dt
            pl.BlockSpec((1, OUT), lambda t: (0, 0)),          # bias
        ],
        out_specs=pl.BlockSpec((Tc, Bp, OUT), lambda t: (t, 0, 0)),
        scratch_shapes=[
            pltpu.VMEM((Bp, Sp2), f32),        # carried recurrent state
            pltpu.VMEM((Tc, Bp, Sp2), f32),    # BU chunk
            pltpu.VMEM((Tc, Bp, Sp2), f32),    # state history chunk
        ],
    )

    # TODO(synk): on v7x (2 TensorCores) a leading batch-parallel grid axis
    # marked "parallel" would shard the independent batch rows across cores;
    # kept single-axis here so the same kernel runs unchanged on v5e/v6e.
    y_tm = pl.pallas_call(
        linear_ssm_kernel,
        out_shape=jax.ShapeDtypeStruct((Tp, Bp, OUT), f32),
        grid_spec=grid_spec,
        compiler_params=pltpu.CompilerParams(
            dimension_semantics=("arbitrary",),
            vmem_limit_bytes=vmem_limit,
        ),
    )(X0, u_tm, M, Bc, Cc, Dt, bias2)

    return jnp.transpose(y_tm[:T, :Bb, :], (1, 0, 2))          # (B, T, OUT)


def reference_forward(u, params, x0=None):
    """Pure-JAX complex reference mirroring the PyTorch module."""
    A = (params["A_re"] + 1j * params["A_im"]).astype(jnp.complex64)
    Bm = (params["B_re"] + 1j * params["B_im"]).astype(jnp.complex64)
    C = (params["C_re"] + 1j * params["C_im"]).astype(jnp.complex64)
    D_w = params["D_w"]
    bias = params["bias"]

    Bb, T, _ = u.shape
    S = A.shape[0]
    uc = u.astype(jnp.complex64)
    x0c = jnp.zeros((Bb, S), jnp.complex64) if x0 is None else x0.astype(jnp.complex64)

    def step(x, u_t):
        xn = x @ A.T + u_t @ Bm.T
        return xn, xn

    _, xs = lax.scan(step, x0c, jnp.transpose(uc, (1, 0, 2)))   # states x_1..x_T
    y = jnp.real(jnp.einsum("ji,tbi->tbj", C, xs))
    y = jnp.transpose(y, (1, 0, 2)) + jnp.einsum("ji,bti->btj", D_w, u) + bias
    return y


def make_params(key, in_features, out_features, state_size):
    ks = jax.random.split(key, 7)
    scale_c = 1.0 / jnp.sqrt(2.0 * state_size)
    # TODO(synk): A and B are abstract (NotImplementedError) in BaseLinearSSM;
    # they are initialized synthetically here (A scaled for stability).
    return {
        "A_re": (0.3 / jnp.sqrt(state_size))
                * jax.random.normal(ks[0], (state_size, state_size), jnp.float32),
        "A_im": (0.3 / jnp.sqrt(state_size))
                * jax.random.normal(ks[1], (state_size, state_size), jnp.float32),
        "B_re": jax.random.normal(ks[2], (state_size, in_features), jnp.float32)
                / jnp.sqrt(in_features),
        "B_im": jax.random.normal(ks[3], (state_size, in_features), jnp.float32)
                / jnp.sqrt(in_features),
        "C_re": scale_c * jax.random.normal(ks[4], (out_features, state_size), jnp.float32),
        "C_im": scale_c * jax.random.normal(ks[5], (out_features, state_size), jnp.float32),
        "D_w": jax.random.normal(ks[6], (out_features, in_features), jnp.float32)
               / jnp.sqrt(in_features),
        "bias": jnp.zeros((out_features,), jnp.float32),
    }


if __name__ == "__main__":
    batch, time, in_features, out_features, state_size = 2, 8, 8, 8, 16

    key = jax.random.PRNGKey(0)
    k_u, k_p, k_x = jax.random.split(key, 3)
    u = jax.random.normal(k_u, (batch, time, in_features), jnp.float32)
    params = make_params(k_p, in_features, out_features, state_size)

    # Case 1: default zero initial state, single time chunk.
    y = jax.block_until_ready(linear_ssm_forward(u, params))
    y_ref = reference_forward(u, params)
    assert y.shape == (batch, time, out_features)
    assert jnp.allclose(y, y_ref, atol=1e-3, rtol=1e-3), "mismatch vs reference (x0=None)"

    # Case 2: complex initial state.
    x0 = (jax.random.normal(k_x, (batch, state_size), jnp.float32)
          + 1j * jax.random.normal(jax.random.fold_in(k_x, 1),
                                   (batch, state_size), jnp.float32))
    y2 = jax.block_until_ready(linear_ssm_forward(u, params, x0=x0))
    y2_ref = reference_forward(u, params, x0=x0)
    assert jnp.allclose(y2, y2_ref, atol=1e-3, rtol=1e-3), "mismatch vs reference (x0)"

    # Case 3: multi-chunk grid (T=24, time_chunk=8 -> 3 chunks) exercises the
    # carried-state path across grid iterations.
    u3 = jax.random.normal(jax.random.fold_in(k_u, 2),
                           (batch, 24, in_features), jnp.float32)
    y3 = jax.block_until_ready(linear_ssm_forward(u3, params, x0=x0, time_chunk=8))
    y3_ref = reference_forward(u3, params, x0=x0)
    assert jnp.allclose(y3, y3_ref, atol=1e-3, rtol=1e-3), "mismatch vs reference (chunked)"

    print("KERNEL_OK")
</pallas_src>

<mosaic_0001>
module attributes {stable_mosaic.version = 11 : i64} {
  func.func @linear_ssm_kernel(%arg0: i32, %arg1: memref<8x128xf32, #tpu.memory_space<vmem>>, %arg2: memref<8x8x8xf32, #tpu.memory_space<vmem>>, %arg3: memref<128x128xf32, #tpu.memory_space<vmem>>, %arg4: memref<8x128xf32, #tpu.memory_space<vmem>>, %arg5: memref<128x8xf32, #tpu.memory_space<vmem>>, %arg6: memref<8x8xf32, #tpu.memory_space<vmem>>, %arg7: memref<1x8xf32, #tpu.memory_space<vmem>>, %arg8: memref<8x8x8xf32, #tpu.memory_space<vmem>>, %arg9: memref<8x128xf32, #tpu.memory_space<vmem>>, %arg10: memref<8x8x128xf32, #tpu.memory_space<vmem>>, %arg11: memref<8x8x128xf32, #tpu.memory_space<vmem>>) attributes {dimension_semantics = [#tpu.dimension_semantics<arbitrary>], iteration_bounds = array<i64: 1>, scalar_prefetch = 0 : i64, scratch_operands = 3 : i64, tpu.core_type = #tpu.core_type<tc>, window_params = [{pipeline_mode = #tpu.pipeline_mode<synchronous>, transform_indices = @transform_0, window_bounds = array<i64: 8, 128>}, {transform_indices = @transform_1, window_bounds = array<i64: 8, 8, 8>}, {pipeline_mode = #tpu.pipeline_mode<synchronous>, transform_indices = @transform_2, window_bounds = array<i64: 128, 128>}, {pipeline_mode = #tpu.pipeline_mode<synchronous>, transform_indices = @transform_3, window_bounds = array<i64: 8, 128>}, {pipeline_mode = #tpu.pipeline_mode<synchronous>, transform_indices = @transform_4, window_bounds = array<i64: 128, 8>}, {pipeline_mode = #tpu.pipeline_mode<synchronous>, transform_indices = @transform_5, window_bounds = array<i64: 8, 8>}, {pipeline_mode = #tpu.pipeline_mode<synchronous>, transform_indices = @transform_6, window_bounds = array<i64: 1, 8>}, {transform_indices = @transform_7, window_bounds = array<i64: 8, 8, 8>}]} {
    %c0_i32 = arith.constant 0 : i32
    %0 = arith.cmpi eq, %arg0, %c0_i32 : i32
    %1 = arith.extui %0 : i1 to i32
    %c0_i32_0 = arith.constant 0 : i32
    %2 = arith.cmpi ne, %1, %c0_i32_0 : i32
    scf.if %2 {
      %c0_72 = arith.constant 0 : index
      %c0_73 = arith.constant 0 : index
      %98 = vector.load %arg1[%c0_72, %c0_73] : memref<8x128xf32, #tpu.memory_space<vmem>>, vector<8x128xf32>
      %c0_74 = arith.constant 0 : index
      %c0_75 = arith.constant 0 : index
      %99 = vector.load %arg9[%c0_74, %c0_75] : memref<8x128xf32, #tpu.memory_space<vmem>>, vector<8x128xf32>
      tpu.vector_store %arg9[%c0_74, %c0_75], %98 {strides = array<i32>} : memref<8x128xf32, #tpu.memory_space<vmem>>, vector<8x128xf32>,
    } else {
    }
    %c0 = arith.constant 0 : index
    %c0_1 = arith.constant 0 : index
    %c0_2 = arith.constant 0 : index
    %3 = vector.load %arg2[%c0, %c0_1, %c0_2] : memref<8x8x8xf32, #tpu.memory_space<vmem>>, vector<8x8x8xf32>
    %4 = vector.shape_cast %3 : vector<8x8x8xf32> to vector<64x8xf32>
    %c0_3 = arith.constant 0 : index
    %c0_4 = arith.constant 0 : index
    %5 = vector.load %arg4[%c0_3, %c0_4] : memref<8x128xf32, #tpu.memory_space<vmem>>, vector<8x128xf32>
    %cst = arith.constant dense<0.000000e+00> : vector<64x128xf32>
    %6 = tpu.matmul %4, %5, %cst {dimension_numbers = #tpu.dot_dimension_numbers<[1], [0], [0], [1], [0, 0, 1, 1], [], []>} : vector<64x8xf32>, vector<8x128xf32>, vector<64x128xf32> -> vector<64x128xf32>
    %7 = vector.shape_cast %6 : vector<64x128xf32> to vector<8x8x128xf32>
    %c0_5 = arith.constant 0 : index
    %c0_6 = arith.constant 0 : index
    %c0_7 = arith.constant 0 : index
    %8 = vector.load %arg10[%c0_5, %c0_6, %c0_7] : memref<8x8x128xf32, #tpu.memory_space<vmem>>, vector<8x8x128xf32>
    tpu.vector_store %arg10[%c0_5, %c0_6, %c0_7], %7 {strides = array<i32>} : memref<8x8x128xf32, #tpu.memory_space<vmem>>, vector<8x8x128xf32>,
    %c0_8 = arith.constant 0 : index
    %c0_9 = arith.constant 0 : index
    %9 = vector.load %arg3[%c0_8, %c0_9] : memref<128x128xf32, #tpu.memory_space<vmem>>, vector<128x128xf32>
    %c0_10 = arith.constant 0 : index
    %c0_11 = arith.constant 0 : index
    %10 = vector.load %arg9[%c0_10, %c0_11] : memref<8x128xf32, #tpu.memory_space<vmem>>, vector<8x128xf32>
    %c0_i32_12 = arith.constant 0 : i32
    %cst_13 = arith.constant dense<0.000000e+00> : vector<8x128xf32>
    %11 = tpu.matmul %10, %9, %cst_13 {dimension_numbers = #tpu.dot_dimension_numbers<[1], [0], [0], [1], [0, 0, 1, 1], [], []>} : vector<8x128xf32>, vector<128x128xf32>, vector<8x128xf32> -> vector<8x128xf32>
    %12 = arith.index_cast %c0_i32_12 : i32 to index
    %c0_14 = arith.constant 0 : index
    %c0_15 = arith.constant 0 : index
    %13 = vector.load %arg10[%12, %c0_14, %c0_15] : memref<8x8x128xf32, #tpu.memory_space<vmem>>, vector<1x8x128xf32>
    %14 = vector.shape_cast %13 : vector<1x8x128xf32> to vector<8x128xf32>
    %15 = arith.addf %11, %14 : vector<8x128xf32>
    %16 = arith.index_cast %c0_i32_12 : i32 to index
    %c0_16 = arith.constant 0 : index
    %c0_17 = arith.constant 0 : index
    %17 = vector.load %arg11[%16, %c0_16, %c0_17] : memref<8x8x128xf32, #tpu.memory_space<vmem>>, vector<1x8x128xf32>
    %18 = vector.shape_cast %17 : vector<1x8x128xf32> to vector<8x128xf32>
    %19 = vector.shape_cast %15 : vector<8x128xf32> to vector<1x8x128xf32>
    tpu.vector_store %arg11[%16, %c0_16, %c0_17], %19 {strides = array<i32>} : memref<8x8x128xf32, #tpu.memory_space<vmem>>, vector<1x8x128xf32>,
    %c1_i32 = arith.constant 1 : i32
    %cst_18 = arith.constant dense<0.000000e+00> : vector<8x128xf32>
    %20 = tpu.matmul %15, %9, %cst_18 {dimension_numbers = #tpu.dot_dimension_numbers<[1], [0], [0], [1], [0, 0, 1, 1], [], []>} : vector<8x128xf32>, vector<128x128xf32>, vector<8x128xf32> -> vector<8x128xf32>
    %21 = arith.index_cast %c1_i32 : i32 to index
    %c0_19 = arith.constant 0 : index
    %c0_20 = arith.constant 0 : index
    %22 = vector.load %arg10[%21, %c0_19, %c0_20] : memref<8x8x128xf32, #tpu.memory_space<vmem>>, vector<1x8x128xf32>
    %23 = vector.shape_cast %22 : vector<1x8x128xf32> to vector<8x128xf32>
    %24 = arith.addf %20, %23 : vector<8x128xf32>
    %25 = arith.index_cast %c1_i32 : i32 to index
    %c0_21 = arith.constant 0 : index
    %c0_22 = arith.constant 0 : index
    %26 = vector.load %arg11[%25, %c0_21, %c0_22] : memref<8x8x128xf32, #tpu.memory_space<vmem>>, vector<1x8x128xf32>
    %27 = vector.shape_cast %26 : vector<1x8x128xf32> to vector<8x128xf32>
    %28 = vector.shape_cast %24 : vector<8x128xf32> to vector<1x8x128xf32>
    tpu.vector_store %arg11[%25, %c0_21, %c0_22], %28 {strides = array<i32>} : memref<8x8x128xf32, #tpu.memory_space<vmem>>, vector<1x8x128xf32>,
    %c2_i32 = arith.constant 2 : i32
    %cst_23 = arith.constant dense<0.000000e+00> : vector<8x128xf32>
    %29 = tpu.matmul %24, %9, %cst_23 {dimension_numbers = #tpu.dot_dimension_numbers<[1], [0], [0], [1], [0, 0, 1, 1], [], []>} : vector<8x128xf32>, vector<128x128xf32>, vector<8x128xf32> -> vector<8x128xf32>
    %30 = arith.index_cast %c2_i32 : i32 to index
    %c0_24 = arith.constant 0 : index
    %c0_25 = arith.constant 0 : index
    %31 = vector.load %arg10[%30, %c0_24, %c0_25] : memref<8x8x128xf32, #tpu.memory_space<vmem>>, vector<1x8x128xf32>
    %32 = vector.shape_cast %31 : vector<1x8x128xf32> to vector<8x128xf32>
    %33 = arith.addf %29, %32 : vector<8x128xf32>
    %34 = arith.index_cast %c2_i32 : i32 to index
    %c0_26 = arith.constant 0 : index
    %c0_27 = arith.constant 0 : index
    %35 = vector.load %arg11[%34, %c0_26, %c0_27] : memref<8x8x128xf32, #tpu.memory_space<vmem>>, vector<1x8x128xf32>
    %36 = vector.shape_cast %35 : vector<1x8x128xf32> to vector<8x128xf32>
    %37 = vector.shape_cast %33 : vector<8x128xf32> to vector<1x8x128xf32>
    tpu.vector_store %arg11[%34, %c0_26, %c0_27], %37 {strides = array<i32>} : memref<8x8x128xf32, #tpu.memory_space<vmem>>, vector<1x8x128xf32>,
    %c3_i32 = arith.constant 3 : i32
    %cst_28 = arith.constant dense<0.000000e+00> : vector<8x128xf32>
    %38 = tpu.matmul %33, %9, %cst_28 {dimension_numbers = #tpu.dot_dimension_numbers<[1], [0], [0], [1], [0, 0, 1, 1], [], []>} : vector<8x128xf32>, vector<128x128xf32>, vector<8x128xf32> -> vector<8x128xf32>
    %39 = arith.index_cast %c3_i32 : i32 to index
    %c0_29 = arith.constant 0 : index
    %c0_30 = arith.constant 0 : index
    %40 = vector.load %arg10[%39, %c0_29, %c0_30] : memref<8x8x128xf32, #tpu.memory_space<vmem>>, vector<1x8x128xf32>
    %41 = vector.shape_cast %40 : vector<1x8x128xf32> to vector<8x128xf32>
    %42 = arith.addf %38, %41 : vector<8x128xf32>
    %43 = arith.index_cast %c3_i32 : i32 to index
    %c0_31 = arith.constant 0 : index
    %c0_32 = arith.constant 0 : index
    %44 = vector.load %arg11[%43, %c0_31, %c0_32] : memref<8x8x128xf32, #tpu.memory_space<vmem>>, vector<1x8x128xf32>
    %45 = vector.shape_cast %44 : vector<1x8x128xf32> to vector<8x128xf32>
    %46 = vector.shape_cast %42 : vector<8x128xf32> to vector<1x8x128xf32>
    tpu.vector_store %arg11[%43, %c0_31, %c0_32], %46 {strides = array<i32>} : memref<8x8x128xf32, #tpu.memory_space<vmem>>, vector<1x8x128xf32>,
    %c4_i32 = arith.constant 4 : i32
    %cst_33 = arith.constant dense<0.000000e+00> : vector<8x128xf32>
    %47 = tpu.matmul %42, %9, %cst_33 {dimension_numbers = #tpu.dot_dimension_numbers<[1], [0], [0], [1], [0, 0, 1, 1], [], []>} : vector<8x128xf32>, vector<128x128xf32>, vector<8x128xf32> -> vector<8x128xf32>
    %48 = arith.index_cast %c4_i32 : i32 to index
    %c0_34 = arith.constant 0 : index
    %c0_35 = arith.constant 0 : index
    %49 = vector.load %arg10[%48, %c0_34, %c0_35] : memref<8x8x128xf32, #tpu.memory_space<vmem>>, vector<1x8x128xf32>
    %50 = vector.shape_cast %49 : vector<1x8x128xf32> to vector<8x128xf32>
    %51 = arith.addf %47, %50 : vector<8x128xf32>
    %52 = arith.index_cast %c4_i32 : i32 to index
    %c0_36 = arith.constant 0 : index
    %c0_37 = arith.constant 0 : index
    %53 = vector.load %arg11[%52, %c0_36, %c0_37] : memref<8x8x128xf32, #tpu.memory_space<vmem>>, vector<1x8x128xf32>
    %54 = vector.shape_cast %53 : vector<1x8x128xf32> to vector<8x128xf32>
    %55 = vector.shape_cast %51 : vector<8x128xf32> to vector<1x8x128xf32>
    tpu.vector_store %arg11[%52, %c0_36, %c0_37], %55 {strides = array<i32>} : memref<8x8x128xf32, #tpu.memory_space<vmem>>, vector<1x8x128xf32>,
    %c5_i32 = arith.constant 5 : i32
    %cst_38 = arith.constant dense<0.000000e+00> : vector<8x128xf32>
    %56 = tpu.matmul %51, %9, %cst_38 {dimension_numbers = #tpu.dot_dimension_numbers<[1], [0], [0], [1], [0, 0, 1, 1], [], []>} : vector<8x128xf32>, vector<128x128xf32>, vector<8x128xf32> -> vector<8x128xf32>
    %57 = arith.index_cast %c5_i32 : i32 to index
    %c0_39 = arith.constant 0 : index
    %c0_40 = arith.constant 0 : index
    %58 = vector.load %arg10[%57, %c0_39, %c0_40] : memref<8x8x128xf32, #tpu.memory_space<vmem>>, vector<1x8x128xf32>
    %59 = vector.shape_cast %58 : vector<1x8x128xf32> to vector<8x128xf32>
    %60 = arith.addf %56, %59 : vector<8x128xf32>
    %61 = arith.index_cast %c5_i32 : i32 to index
    %c0_41 = arith.constant 0 : index
    %c0_42 = arith.constant 0 : index
    %62 = vector.load %arg11[%61, %c0_41, %c0_42] : memref<8x8x128xf32, #tpu.memory_space<vmem>>, vector<1x8x128xf32>
    %63 = vector.shape_cast %62 : vector<1x8x128xf32> to vector<8x128xf32>
    %64 = vector.shape_cast %60 : vector<8x128xf32> to vector<1x8x128xf32>
    tpu.vector_store %arg11[%61, %c0_41, %c0_42], %64 {strides = array<i32>} : memref<8x8x128xf32, #tpu.memory_space<vmem>>, vector<1x8x128xf32>,
    %c6_i32 = arith.constant 6 : i32
    %cst_43 = arith.constant dense<0.000000e+00> : vector<8x128xf32>
    %65 = tpu.matmul %60, %9, %cst_43 {dimension_numbers = #tpu.dot_dimension_numbers<[1], [0], [0], [1], [0, 0, 1, 1], [], []>} : vector<8x128xf32>, vector<128x128xf32>, vector<8x128xf32> -> vector<8x128xf32>
    %66 = arith.index_cast %c6_i32 : i32 to index
    %c0_44 = arith.constant 0 : index
    %c0_45 = arith.constant 0 : index
    %67 = vector.load %arg10[%66, %c0_44, %c0_45] : memref<8x8x128xf32, #tpu.memory_space<vmem>>, vector<1x8x128xf32>
    %68 = vector.shape_cast %67 : vector<1x8x128xf32> to vector<8x128xf32>
    %69 = arith.addf %65, %68 : vector<8x128xf32>
    %70 = arith.index_cast %c6_i32 : i32 to index
    %c0_46 = arith.constant 0 : index
    %c0_47 = arith.constant 0 : index
    %71 = vector.load %arg11[%70, %c0_46, %c0_47] : memref<8x8x128xf32, #tpu.memory_space<vmem>>, vector<1x8x128xf32>
    %72 = vector.shape_cast %71 : vector<1x8x128xf32> to vector<8x128xf32>
    %73 = vector.shape_cast %69 : vector<8x128xf32> to vector<1x8x128xf32>
    tpu.vector_store %arg11[%70, %c0_46, %c0_47], %73 {strides = array<i32>} : memref<8x8x128xf32, #tpu.memory_space<vmem>>, vector<1x8x128xf32>,
    %c7_i32 = arith.constant 7 : i32
    %cst_48 = arith.constant dense<0.000000e+00> : vector<8x128xf32>
    %74 = tpu.matmul %69, %9, %cst_48 {dimension_numbers = #tpu.dot_dimension_numbers<[1], [0], [0], [1], [0, 0, 1, 1], [], []>} : vector<8x128xf32>, vector<128x128xf32>, vector<8x128xf32> -> vector<8x128xf32>
    %75 = arith.index_cast %c7_i32 : i32 to index
    %c0_49 = arith.constant 0 : index
    %c0_50 = arith.constant 0 : index
    %76 = vector.load %arg10[%75, %c0_49, %c0_50] : memref<8x8x128xf32, #tpu.memory_space<vmem>>, vector<1x8x128xf32>
    %77 = vector.shape_cast %76 : vector<1x8x128xf32> to vector<8x128xf32>
    %78 = arith.addf %74, %77 : vector<8x128xf32>
    %79 = arith.index_cast %c7_i32 : i32 to index
    %c0_51 = arith.constant 0 : index
    %c0_52 = arith.constant 0 : index
    %80 = vector.load %arg11[%79, %c0_51, %c0_52] : memref<8x8x128xf32, #tpu.memory_space<vmem>>, vector<1x8x128xf32>
    %81 = vector.shape_cast %80 : vector<1x8x128xf32> to vector<8x128xf32>
    %82 = vector.shape_cast %78 : vector<8x128xf32> to vector<1x8x128xf32>
    tpu.vector_store %arg11[%79, %c0_51, %c0_52], %82 {strides = array<i32>} : memref<8x8x128xf32, #tpu.memory_space<vmem>>, vector<1x8x128xf32>,
    %c8_i32 = arith.constant 8 : i32
    %c0_53 = arith.constant 0 : index
    %c0_54 = arith.constant 0 : index
    %83 = vector.load %arg9[%c0_53, %c0_54] : memref<8x128xf32, #tpu.memory_space<vmem>>, vector<8x128xf32>
    tpu.vector_store %arg9[%c0_53, %c0_54], %78 {strides = array<i32>} : memref<8x128xf32, #tpu.memory_space<vmem>>, vector<8x128xf32>,
    %c0_55 = arith.constant 0 : index
    %c0_56 = arith.constant 0 : index
    %c0_57 = arith.constant 0 : index
    %84 = vector.load %arg2[%c0_55, %c0_56, %c0_57] : memref<8x8x8xf32, #tpu.memory_space<vmem>>, vector<8x8x8xf32>
    %85 = vector.shape_cast %84 : vector<8x8x8xf32> to vector<64x8xf32>
    %c0_58 = arith.constant 0 : index
    %c0_59 = arith.constant 0 : index
    %86 = vector.load %arg6[%c0_58, %c0_59] : memref<8x8xf32, #tpu.memory_space<vmem>>, vector<8x8xf32>
    %cst_60 = arith.constant dense<0.000000e+00> : vector<64x8xf32>
    %87 = tpu.matmul %85, %86, %cst_60 {dimension_numbers = #tpu.dot_dimension_numbers<[1], [0], [0], [1], [0, 0, 1, 1], [], []>} : vector<64x8xf32>, vector<8x8xf32>, vector<64x8xf32> -> vector<64x8xf32>
    %c0_61 = arith.constant 0 : index
    %c0_62 = arith.constant 0 : index
    %88 = vector.load %arg7[%c0_61, %c0_62] : memref<1x8xf32, #tpu.memory_space<vmem>>, vector<1x8xf32>
    %89 = vector.broadcast %88 : vector<1x8xf32> to vector<64x8xf32>
    %90 = arith.addf %87, %89 : vector<64x8xf32>
    %c0_63 = arith.constant 0 : index
    %c0_64 = arith.constant 0 : index
    %c0_65 = arith.constant 0 : index
    %91 = vector.load %arg11[%c0_63, %c0_64, %c0_65] : memref<8x8x128xf32, #tpu.memory_space<vmem>>, vector<8x8x128xf32>
    %92 = vector.shape_cast %91 : vector<8x8x128xf32> to vector<64x128xf32>
    %c0_66 = arith.constant 0 : index
    %c0_67 = arith.constant 0 : index
    %93 = vector.load %arg5[%c0_66, %c0_67] : memref<128x8xf32, #tpu.memory_space<vmem>>, vector<128x8xf32>
    %cst_68 = arith.constant dense<0.000000e+00> : vector<64x8xf32>
    %94 = tpu.matmul %92, %93, %cst_68 {dimension_numbers = #tpu.dot_dimension_numbers<[1], [0], [0], [1], [0, 0, 1, 1], [], []>} : vector<64x128xf32>, vector<128x8xf32>, vector<64x8xf32> -> vector<64x8xf32>
    %95 = arith.addf %94, %90 : vector<64x8xf32>
    %96 = vector.shape_cast %95 : vector<64x8xf32> to vector<8x8x8xf32>
    %c0_69 = arith.constant 0 : index
    %c0_70 = arith.constant 0 : index
    %c0_71 = arith.constant 0 : index
    %97 = vector.load %arg8[%c0_69, %c0_70, %c0_71] : memref<8x8x8xf32, #tpu.memory_space<vmem>>, vector<8x8x8xf32>
    tpu.vector_store %arg8[%c0_69, %c0_70, %c0_71], %96 {strides = array<i32>} : memref<8x8x8xf32, #tpu.memory_space<vmem>>, vector<8x8x8xf32>,
    return
  }
  func.func @transform_0(%arg0: i32) -> (i32, i32) {
    %c0_i32 = arith.constant 0 : i32
    %c0_i32_0 = arith.constant 0 : i32
    %c0_i32_1 = arith.constant 0 : i32
    return %c0_i32, %c0_i32_0 : i32, i32
  }
  func.func @transform_1(%arg0: i32) -> (i32, i32, i32) {
    %c0_i32 = arith.constant 0 : i32
    %c0_i32_0 = arith.constant 0 : i32
    %c0_i32_1 = arith.constant 0 : i32
    return %arg0, %c0_i32, %c0_i32_0 : i32, i32, i32
  }
  func.func @transform_2(%arg0: i32) -> (i32, i32) {
    %c0_i32 = arith.constant 0 : i32
    %c0_i32_0 = arith.constant 0 : i32
    %c0_i32_1 = arith.constant 0 : i32
    return %c0_i32, %c0_i32_0 : i32, i32
  }
  func.func @transform_3(%arg0: i32) -> (i32, i32) {
    %c0_i32 = arith.constant 0 : i32
    %c0_i32_0 = arith.constant 0 : i32
    %c0_i32_1 = arith.constant 0 : i32
    return %c0_i32, %c0_i32_0 : i32, i32
  }
  func.func @transform_4(%arg0: i32) -> (i32, i32) {
    %c0_i32 = arith.constant 0 : i32
    %c0_i32_0 = arith.constant 0 : i32
    %c0_i32_1 = arith.constant 0 : i32
    return %c0_i32, %c0_i32_0 : i32, i32
  }
  func.func @transform_5(%arg0: i32) -> (i32, i32) {
    %c0_i32 = arith.constant 0 : i32
    %c0_i32_0 = arith.constant 0 : i32
    %c0_i32_1 = arith.constant 0 : i32
    return %c0_i32, %c0_i32_0 : i32, i32
  }
  func.func @transform_6(%arg0: i32) -> (i32, i32) {
    %c0_i32 = arith.constant 0 : i32
    %c0_i32_0 = arith.constant 0 : i32
    %c0_i32_1 = arith.constant 0 : i32
    return %c0_i32, %c0_i32_0 : i32, i32
  }
  func.func @transform_7(%arg0: i32) -> (i32, i32, i32) {
    %c0_i32 = arith.constant 0 : i32
    %c0_i32_0 = arith.constant 0 : i32
    %c0_i32_1 = arith.constant 0 : i32
    return %arg0, %c0_i32, %c0_i32_0 : i32, i32, i32
  }
}

</mosaic_0001>

<llo_original>
// kernel: tpu_custom_call.1
$region0: #{tpu_custom_call.1}
  #allocation0 [shape = 'u32[]', space=smem, size = 0x4, offset = 0x4, fixed_abs, tag = 'smem constant byte address 0x4 - core index']
  #allocation1 [shape = 'u32[144,128]{1,0:T(1,128)}', space=vmem, size = 0x12000, scoped, tag = 'internal scratch']
  #allocation2 [shape = 'f32[8,128]{1,0:T(8,128)}', space=vmem, size = 0x1000, scoped, tag = 'scratch operand']
  #allocation3 [shape = 'f32[8,8,128]{2,1,0:T(8,128)}', space=vmem, size = 0x8000, scoped, tag = 'scratch operand']
  #allocation4 [shape = 'f32[8,8,128]{2,1,0:T(8,128)}', space=vmem, size = 0x8000, scoped, tag = 'scratch operand']
  %s0 = inlined_call_operand.vmem [shape: f32[8,128], index: 0, kind: input, shape index: {}]
  %s1 = inlined_call_operand.hbm [shape: f32[8,8,8], index: 1, kind: input, shape index: {}]
  %s2 = inlined_call_operand.vmem [shape: f32[128,128], index: 2, kind: input, shape index: {}]
  %s3 = inlined_call_operand.hbm [shape: f32[8,128], index: 3, kind: input, shape index: {}]
  %s4 = inlined_call_operand.vmem [shape: f32[128,8], index: 4, kind: input, shape index: {}]
  %s5 = inlined_call_operand.vmem [shape: f32[8,8], index: 5, kind: input, shape index: {}]
  %s6 = inlined_call_operand.vmem [shape: f32[1,8], index: 6, kind: input, shape index: {}]
  %s7 = inlined_call_operand.hbm [shape: f32[8,8,8], index: 7, kind: output, shape index: {}]
  %s8 = sld [smem:[#allocation0]]
  $region50: #{tpu_custom_call.1} parent=0
    _
  %s10 = ssub.s32 1, %s8
  %s11 = scalar_select 0, %s10, %s8
  $region1: #{tpu_custom_call.1} parent=0
    #allocation5 [shape = 'u8[32768]{0}', space=vmem, size = 0x8000, scoped, tag = 'input window, operand 1, single buffered']
    #allocation6 [shape = 's32[1]{0}', space=sflag, size = 0x4, scoped, tag = 'scoped memory for tpu_custom_call.1']
    #allocation7 [shape = 's32[1]{0}', space=sflag, size = 0x4, scoped, tag = 'scoped memory for tpu_custom_call.1']
    #allocation8 [shape = 'u8[4096]{0}', space=vmem, size = 0x1000, scoped, tag = 'input window, operand 3, single buffered']
    #allocation9 [shape = 's32[1]{0}', space=sflag, size = 0x4, scoped, tag = 'scoped memory for tpu_custom_call.1']
    #allocation10 [shape = 'u8[32768]{0}', space=vmem, size = 0x8000, scoped, tag = 'output window, operand 0, single buffered']
    %12 = vsyncpa [#allocation6], 0
    %13 = vsyncpa [#allocation9], 0
    %14 = vsyncpa [#allocation7], 0
    // Predicated region
    $region2: #{tpu_custom_call.1} parent=1 // pred_check
      _
    $region3: #{tpu_custom_call.1} parent=1 // pred_check_branch
      %16 = sbr.rel (0) target = $region5
    $region4: #{tpu_custom_call.1} parent=1 // pred_region
      _
    $region5: #{tpu_custom_call.1} parent=1 // pred_fallthru
      _
    // Predicated region
    $region6: #{tpu_custom_call.1} parent=1 // pred_check
      _
    $region7: #{tpu_custom_call.1} parent=1 // pred_check_branch
      %18 = sbr.rel (0) target = $region9
    $region8: #{tpu_custom_call.1} parent=1 // pred_region
      %s20 = ssub.s32 1024, 1024
      %21 = vsyncadd [#allocation6], %s20
      %s22 = sshll.u32 [#allocation5], 4
      %s23 = int_to_ptr.vmem [resolvable:$true] %s22
      %28 = dma.hbm_to_vmem [thread:$0]  %s1, 1024, %s23, [#allocation6], 128, 128, 8
    $region9: #{tpu_custom_call.1} parent=1 // pred_fallthru
      _
    // Predicated region
    $region10: #{tpu_custom_call.1} parent=1 // pred_check
      _
    $region11: #{tpu_custom_call.1} parent=1 // pred_check_branch
      %30 = sbr.rel (0) target = $region13
    $region12: #{tpu_custom_call.1} parent=1 // pred_region
      _
    $region13: #{tpu_custom_call.1} parent=1 // pred_fallthru
      _
    // Predicated region
    $region14: #{tpu_custom_call.1} parent=1 // pred_check
      _
    $region15: #{tpu_custom_call.1} parent=1 // pred_check_branch
      %32 = sbr.rel (0) target = $region17
    $region16: #{tpu_custom_call.1} parent=1 // pred_region
      %s34 = ssub.s32 128, 128
      %35 = vsyncadd [#allocation9], %s34
      %s37 = sshll.u32 [#allocation8], 4
      %s38 = int_to_ptr.vmem [resolvable:$true] %s37
      %40 = dma.hbm_to_vmem [thread:$0]  %s3, 128, %s38, [#allocation9]
    $region17: #{tpu_custom_call.1} parent=1 // pred_fallthru
      _
    // Predicated region
    $region18: #{tpu_custom_call.1} parent=1 // pred_check
      _
    $region19: #{tpu_custom_call.1} parent=1 // pred_check_branch
      %42 = sbr.rel (0) target = $region21
    $region20: #{tpu_custom_call.1} parent=1 // pred_region
      _
    $region21: #{tpu_custom_call.1} parent=1 // pred_fallthru
      _
    // Predicated region
    $region22: #{tpu_custom_call.1} parent=1 // pred_check
      _
    $region23: #{tpu_custom_call.1} parent=1 // pred_check_branch
      %44 = sbr.rel (0) target = $region25
    $region24: #{tpu_custom_call.1} parent=1 // pred_region
      _
    $region25: #{tpu_custom_call.1} parent=1 // pred_fallthru
      _
    // Predicated region
    $region26: #{tpu_custom_call.1} parent=1 // pred_check
      _
    $region27: #{tpu_custom_call.1} parent=1 // pred_check_branch
      %46 = sbr.rel (0) target = $region29
    $region28: #{tpu_custom_call.1} parent=1 // pred_region
      _
    $region29: #{tpu_custom_call.1} parent=1 // pred_fallthru
      _
    // Predicated region
    $region30: #{tpu_custom_call.1} parent=1 // pred_check
      _
    $region31: #{tpu_custom_call.1} parent=1 // pred_check_branch
      %48 = sbr.rel (0) target = $region33
    $region32: #{tpu_custom_call.1} parent=1 // pred_region
      %49 = dma.done [#allocation6], 1024
    $region33: #{tpu_custom_call.1} parent=1 // pred_fallthru
      _
    // Predicated region
    $region34: #{tpu_custom_call.1} parent=1 // pred_check
      _
    $region35: #{tpu_custom_call.1} parent=1 // pred_check_branch
      %51 = sbr.rel (0) target = $region37
    $region36: #{tpu_custom_call.1} parent=1 // pred_region
      %52 = dma.done [#allocation9], 128
    $region37: #{tpu_custom_call.1} parent=1 // pred_fallthru
      _
    %p53 = scmp.eq.s32.totalorder 0, 0
    // Predicated region
    $region38: #{tpu_custom_call.1} parent=1 // pred_check
      %p54 = pneg %p53
    $region39: #{tpu_custom_call.1} parent=1 // pred_check_branch
      %56 = sbr.rel (%p54) target = $region41
    $region40: #{tpu_custom_call.1} parent=1 // pred_region
      %v57 = vld [vmem:[%s0] sm:$0xff]
      %58 = vst [vmem:[#allocation2] sm:$0xff] %v57
    $region41: #{tpu_custom_call.1} parent=1 // pred_fallthru
      _
    %v59 = vld [vmem:[#allocation5] sm:$0xff]
    %v60 = vld [vmem:[#allocation5 + $0x8] sm:$0xff]
    %v61 = vld [vmem:[#allocation5 + $0x10] sm:$0xff]
    %v62 = vld [vmem:[#allocation5 + $0x18] sm:$0xff]
    %v63 = vld [vmem:[#allocation5 + $0x20] sm:$0xff]
    %v64 = vld [vmem:[#allocation5 + $0x28] sm:$0xff]
    %v65 = vld [vmem:[#allocation5 + $0x30] sm:$0xff]
    %v66 = vld [vmem:[#allocation5 + $0x38] sm:$0xff]
    %v67 = vld [vmem:[#allocation8] sm:$0xff]
    %vm68 = vcmask 64512
    %v70 = vsel %vm68, %v59, 0
    %v73 = vsel %vm68, %v60, 0
    %v76 = vsel %vm68, %v61, 0
    %v79 = vsel %vm68, %v62, 0
    %v82 = vsel %vm68, %v63, 0
    %v85 = vsel %vm68, %v64, 0
    %v88 = vsel %vm68, %v65, 0
    %v91 = vsel %vm68, %v66, 0
    %93 = vmatprep.subr.mxu0 0.0
    %94 = vmatpush1.msra.mxu0 %v67
    %95 = vmatprep.subr.mxu0 0.0
    %96 = vmatpush1.msra.mxu0 0.0
    %97 = vmatprep.subr.mxu0 0.0
    %98 = vmatpush1.msra.mxu0 0.0
    %99 = vmatprep.subr.mxu0 0.0
    %100 = vmatpush1.msra.mxu0 0.0
    %101 = vmatprep.subr.mxu0 0.0
    %102 = vmatpush1.msra.mxu0 0.0
    %103 = vmatprep.subr.mxu0 0.0
    %104 = vmatpush1.msra.mxu0 0.0
    %105 = vmatprep.subr.mxu0 0.0
    %106 = vmatpush1.msra.mxu0 0.0
    %107 = vmatprep.subr.mxu0 0.0
    %108 = vmatpush1.msra.mxu0 0.0
    %109 = vmatprep.subr.mxu0 0.0
    %110 = vmatpush1.msra.mxu0 0.0
    %111 = vmatprep.subr.mxu0 0.0
    %112 = vmatpush1.msra.mxu0 0.0
    %113 = vmatprep.subr.mxu0 0.0
    %114 = vmatpush1.msra.mxu0 0.0
    %115 = vmatprep.subr.mxu0 0.0
    %116 = vmatpush1.msra.mxu0 0.0
    %117 = vmatprep.subr.mxu0 0.0
    %118 = vmatpush1.msra.mxu0 0.0
    %119 = vmatprep.subr.mxu0 0.0
    %120 = vmatpush1.msra.mxu0 0.0
    %121 = vmatprep.subr.mxu0 0.0
    %122 = vmatpush1.msra.mxu0 0.0
    %123 = vmatprep.subr.mxu0 0.0
    %124 = vmatpush1.msra.mxu0 0.0
    %125 = vmatprep.subr.mxu0 0.0
    %126 = vmatpush1.msra.mxu0 0.0
    %127 = vmatprep.subr.mxu0 0.0
    %128 = vmatpush1.msra.mxu0 0.0
    %129 = vmatprep.subr.mxu0 0.0
    %130 = vmatpush1.msra.mxu0 0.0
    %131 = vmatprep.subr.mxu0 0.0
    %132 = vmatpush1.msra.mxu0 0.0
    %133 = vmatprep.subr.mxu0 0.0
    %134 = vmatpush1.msra.mxu0 0.0
    %135 = vmatprep.subr.mxu0 0.0
    %136 = vmatpush1.msra.mxu0 0.0
    %137 = vmatprep.subr.mxu0 0.0
    %138 = vmatpush1.msra.mxu0 0.0
    %139 = vmatprep.subr.mxu0 0.0
    %140 = vmatpush1.msra.mxu0 0.0
    %141 = vmatprep.subr.mxu0 0.0
    %142 = vmatpush1.msra.mxu0 0.0
    %143 = vmatprep.subr.mxu0 0.0
    %144 = vmatpush1.msra.mxu0 0.0
    %145 = vmatprep.subr.mxu0 0.0
    %146 = vmatpush1.msra.mxu0 0.0
    %147 = vmatprep.subr.mxu0 0.0
    %148 = vmatpush1.msra.mxu0 0.0
    %149 = vmatprep.subr.mxu0 0.0
    %150 = vmatpush1.msra.mxu0 0.0
    %151 = vmatprep.subr.mxu0 0.0
    %152 = vmatpush1.msra.mxu0 0.0
    %153 = vmatprep.subr.mxu0 0.0
    %154 = vmatpush1.msra.mxu0 0.0
    %155 = vmatprep.subr.mxu0 0.0
    %156 = vmatpush1.msra.mxu0 0.0
    %157 = vmatprep.mubr.f32.mxu0 0.0
    %158 = vmatmul.mubr.f32.gmra.mrb[0].mxu0 %v70
    %v159 = vpop.f32.mrb[0].mxu0
    %v160 = vadd.f32 0.0, %v159
    %v161 = vpop.f32.mrb[0].mxu0
    %162 = vmatprep.mubr.f32.mxu0 0.0
    %163 = vmatmul.mubr.f32.gmra.mrb[0].mxu0 %v73
    %v164 = vpop.f32.mrb[0].mxu0
    %v165 = vadd.f32 0.0, %v164
    %v166 = vpop.f32.mrb[0].mxu0
    %167 = vmatprep.mubr.f32.mxu0 0.0
    %168 = vmatmul.mubr.f32.gmra.mrb[0].mxu0 %v76
    %v169 = vpop.f32.mrb[0].mxu0
    %v170 = vadd.f32 0.0, %v169
    %v171 = vpop.f32.mrb[0].mxu0
    %172 = vmatprep.mubr.f32.mxu0 0.0
    %173 = vmatmul.mubr.f32.gmra.mrb[0].mxu0 %v79
    %v174 = vpop.f32.mrb[0].mxu0
    %v175 = vadd.f32 0.0, %v174
    %v176 = vpop.f32.mrb[0].mxu0
    %177 = vmatprep.mubr.f32.mxu0 0.0
    %178 = vmatmul.mubr.f32.gmra.mrb[0].mxu0 %v82
    %v179 = vpop.f32.mrb[0].mxu0
    %v180 = vadd.f32 0.0, %v179
    %v181 = vpop.f32.mrb[0].mxu0
    %182 = vmatprep.mubr.f32.mxu0 0.0
    %183 = vmatmul.mubr.f32.gmra.mrb[0].mxu0 %v85
    %v184 = vpop.f32.mrb[0].mxu0
    %v185 = vadd.f32 0.0, %v184
    %v186 = vpop.f32.mrb[0].mxu0
    %187 = vmatprep.mubr.f32.mxu0 0.0
    %188 = vmatmul.mubr.f32.gmra.mrb[0].mxu0 %v88
    %v189 = vpop.f32.mrb[0].mxu0
    %v190 = vadd.f32 0.0, %v189
    %v191 = vpop.f32.mrb[0].mxu0
    %192 = vmatprep.mubr.f32.mxu0 0.0
    %193 = vmatmul.mubr.f32.gmra.mrb[0].mxu0 %v91
    %v194 = vpop.f32.mrb[0].mxu0
    %v195 = vadd.f32 0.0, %v194
    %v196 = vpop.f32.mrb[0].mxu0
    %197 = vdwg.mxu0
    %198 = vst [vmem:[#allocation3] sm:$0xff] %v160
    %199 = vst [vmem:[#allocation3 + $0x8] sm:$0xff] %v165
    %200 = vst [vmem:[#allocation3 + $0x10] sm:$0xff] %v170
    %201 = vst [vmem:[#allocation3 + $0x18] sm:$0xff] %v175
    %202 = vst [vmem:[#allocation3 + $0x20] sm:$0xff] %v180
    %203 = vst [vmem:[#allocation3 + $0x28] sm:$0xff] %v185
    %204 = vst [vmem:[#allocation3 + $0x30] sm:$0xff] %v190
    %205 = vst [vmem:[#allocation3 + $0x38] sm:$0xff] %v195
    %v206 = vld [vmem:[%s2] sm:$0xff]
    %v207 = vld [vmem:[%s2 + $0x8] sm:$0xff]
    %v208 = vld [vmem:[%s2 + $0x10] sm:$0xff]
    %v209 = vld [vmem:[%s2 + $0x18] sm:$0xff]
    %v210 = vld [vmem:[%s2 + $0x20] sm:$0xff]
    %v211 = vld [vmem:[%s2 + $0x28] sm:$0xff]
    %v212 = vld [vmem:[%s2 + $0x30] sm:$0xff]
    %v213 = vld [vmem:[%s2 + $0x38] sm:$0xff]
    %v214 = vld [vmem:[%s2 + $0x40] sm:$0xff]
    %v215 = vld [vmem:[%s2 + $0x48] sm:$0xff]
    %v216 = vld [vmem:[%s2 + $0x50] sm:$0xff]
    %v217 = vld [vmem:[%s2 + $0x58] sm:$0xff]
    %v218 = vld [vmem:[%s2 + $0x60] sm:$0xff]
    %v219 = vld [vmem:[%s2 + $0x68] sm:$0xff]
    %v220 = vld [vmem:[%s2 + $0x70] sm:$0xff]
    %v221 = vld [vmem:[%s2 + $0x78] sm:$0xff]
    %v222 = vld [vmem:[#allocation2] sm:$0xff]
    %v223 = vld [vmem:[#allocation3] sm:$0xff]
    %224 = vmatprep.subr.mxu0 0.0
    %225 = vmatpush1.msra.mxu0 %v206
    %226 = vmatprep.subr.mxu0 0.0
    %227 = vmatpush1.msra.mxu0 %v207
    %228 = vmatprep.subr.mxu0 0.0
    %229 = vmatpush1.msra.mxu0 %v208
    %230 = vmatprep.subr.mxu0 0.0
    %231 = vmatpush1.msra.mxu0 %v209
    %232 = vmatprep.subr.mxu0 0.0
    %233 = vmatpush1.msra.mxu0 %v210
    %234 = vmatprep.subr.mxu0 0.0
    %235 = vmatpush1.msra.mxu0 %v211
    %236 = vmatprep.subr.mxu0 0.0
    %237 = vmatpush1.msra.mxu0 %v212
    %238 = vmatprep.subr.mxu0 0.0
    %239 = vmatpush1.msra.mxu0 %v213
    %240 = vmatprep.subr.mxu0 0.0
    %241 = vmatpush1.msra.mxu0 %v214
    %242 = vmatprep.subr.mxu0 0.0
    %243 = vmatpush1.msra.mxu0 %v215
    %244 = vmatprep.subr.mxu0 0.0
    %245 = vmatpush1.msra.mxu0 %v216
    %246 = vmatprep.subr.mxu0 0.0
    %247 = vmatpush1.msra.mxu0 %v217
    %248 = vmatprep.subr.mxu0 0.0
    %249 = vmatpush1.msra.mxu0 %v218
    %250 = vmatprep.subr.mxu0 0.0
    %251 = vmatpush1.msra.mxu0 %v219
    %252 = vmatprep.subr.mxu0 0.0
    %253 = vmatpush1.msra.mxu0 %v220
    %254 = vmatprep.subr.mxu0 0.0
    %255 = vmatpush1.msra.mxu0 %v221
    %256 = vmatprep.subr.mxu0 0.0
    %257 = vmatpush1.msra.mxu0 0.0
    %258 = vmatprep.subr.mxu0 0.0
    %259 = vmatpush1.msra.mxu0 0.0
    %260 = vmatprep.subr.mxu0 0.0
    %261 = vmatpush1.msra.mxu0 0.0
    %262 = vmatprep.subr.mxu0 0.0
    %263 = vmatpush1.msra.mxu0 0.0
    %264 = vmatprep.subr.mxu0 0.0
    %265 = vmatpush1.msra.mxu0 0.0
    %266 = vmatprep.subr.mxu0 0.0
    %267 = vmatpush1.msra.mxu0 0.0
    %268 = vmatprep.subr.mxu0 0.0
    %269 = vmatpush1.msra.mxu0 0.0
    %270 = vmatprep.subr.mxu0 0.0
    %271 = vmatpush1.msra.mxu0 0.0
    %272 = vmatprep.subr.mxu0 0.0
    %273 = vmatpush1.msra.mxu0 0.0
    %274 = vmatprep.subr.mxu0 0.0
    %275 = vmatpush1.msra.mxu0 0.0
    %276 = vmatprep.subr.mxu0 0.0
    %277 = vmatpush1.msra.mxu0 0.0
    %278 = vmatprep.subr.mxu0 0.0
    %279 = vmatpush1.msra.mxu0 0.0
    %280 = vmatprep.subr.mxu0 0.0
    %281 = vmatpush1.msra.mxu0 0.0
    %282 = vmatprep.subr.mxu0 0.0
    %283 = vmatpush1.msra.mxu0 0.0
    %284 = vmatprep.subr.mxu0 0.0
    %285 = vmatpush1.msra.mxu0 0.0
    %286 = vmatprep.subr.mxu0 0.0
    %287 = vmatpush1.msra.mxu0 0.0
    %288 = vmatprep.mubr.f32.mxu0 0.0
    %289 = vmatmul.mubr.f32.gmra.mrb[0].mxu0 %v222
    %v290 = vpop.f32.mrb[0].mxu0
    %v291 = vadd.f32 %v223, %v290
    %v292 = vpop.f32.mrb[0].mxu0
    %293 = vdwg.mxu0
    %294 = vst [vmem:[#allocation4] sm:$0xff] %v291
    %s295 = scalar_lea.vmem [#allocation3], 8
    %v296 = vld [vmem:[%s295] sm:$0xff]
    %297 = vmatprep.subr.mxu0 0.0
    %298 = vmatpush1.msra.mxu0 %v206
    %299 = vmatprep.subr.mxu0 0.0
    %300 = vmatpush1.msra.mxu0 %v207
    %301 = vmatprep.subr.mxu0 0.0
    %302 = vmatpush1.msra.mxu0 %v208
    %303 = vmatprep.subr.mxu0 0.0
    %304 = vmatpush1.msra.mxu0 %v209
    %305 = vmatprep.subr.mxu0 0.0
    %306 = vmatpush1.msra.mxu0 %v210
    %307 = vmatprep.subr.mxu0 0.0
    %308 = vmatpush1.msra.mxu0 %v211
    %309 = vmatprep.subr.mxu0 0.0
    %310 = vmatpush1.msra.mxu0 %v212
    %311 = vmatprep.subr.mxu0 0.0
    %312 = vmatpush1.msra.mxu0 %v213
    %313 = vmatprep.subr.mxu0 0.0
    %314 = vmatpush1.msra.mxu0 %v214
    %315 = vmatprep.subr.mxu0 0.0
    %316 = vmatpush1.msra.mxu0 %v215
    %317 = vmatprep.subr.mxu0 0.0
    %318 = vmatpush1.msra.mxu0 %v216
    %319 = vmatprep.subr.mxu0 0.0
    %320 = vmatpush1.msra.mxu0 %v217
    %321 = vmatprep.subr.mxu0 0.0
    %322 = vmatpush1.msra.mxu0 %v218
    %323 = vmatprep.subr.mxu0 0.0
    %324 = vmatpush1.msra.mxu0 %v219
    %325 = vmatprep.subr.mxu0 0.0
    %326 = vmatpush1.msra.mxu0 %v220
    %327 = vmatprep.subr.mxu0 0.0
    %328 = vmatpush1.msra.mxu0 %v221
    %329 = vmatprep.subr.mxu0 0.0
    %330 = vmatpush1.msra.mxu0 0.0
    %331 = vmatprep.subr.mxu0 0.0
    %332 = vmatpush1.msra.mxu0 0.0
    %333 = vmatprep.subr.mxu0 0.0
    %334 = vmatpush1.msra.mxu0 0.0
    %335 = vmatprep.subr.mxu0 0.0
    %336 = vmatpush1.msra.mxu0 0.0
    %337 = vmatprep.subr.mxu0 0.0
    %338 = vmatpush1.msra.mxu0 0.0
    %339 = vmatprep.subr.mxu0 0.0
    %340 = vmatpush1.msra.mxu0 0.0
    %341 = vmatprep.subr.mxu0 0.0
    %342 = vmatpush1.msra.mxu0 0.0
    %343 = vmatprep.subr.mxu0 0.0
    %344 = vmatpush1.msra.mxu0 0.0
    %345 = vmatprep.subr.mxu0 0.0
    %346 = vmatpush1.msra.mxu0 0.0
    %347 = vmatprep.subr.mxu0 0.0
    %348 = vmatpush1.msra.mxu0 0.0
    %349 = vmatprep.subr.mxu0 0.0
    %350 = vmatpush1.msra.mxu0 0.0
    %351 = vmatprep.subr.mxu0 0.0
    %352 = vmatpush1.msra.mxu0 0.0
    %353 = vmatprep.subr.mxu0 0.0
    %354 = vmatpush1.msra.mxu0 0.0
    %355 = vmatprep.subr.mxu0 0.0
    %356 = vmatpush1.msra.mxu0 0.0
    %357 = vmatprep.subr.mxu0 0.0
    %358 = vmatpush1.msra.mxu0 0.0
    %359 = vmatprep.subr.mxu0 0.0
    %360 = vmatpush1.msra.mxu0 0.0
    %361 = vmatprep.mubr.f32.mxu0 0.0
    %362 = vmatmul.mubr.f32.gmra.mrb[0].mxu0 %v291
    %v363 = vpop.f32.mrb[0].mxu0
    %v364 = vadd.f32 %v296, %v363
    %v365 = vpop.f32.mrb[0].mxu0
    %366 = vdwg.mxu0
    %s367 = scalar_lea.vmem [#allocation4], 8
    %368 = vst [vmem:[%s367] sm:$0xff] %v364
    %s369 = scalar_lea.vmem [#allocation3], 16
    %v370 = vld [vmem:[%s369] sm:$0xff]
    %371 = vmatprep.subr.mxu0 0.0
    %372 = vmatpush1.msra.mxu0 %v206
    %373 = vmatprep.subr.mxu0 0.0
    %374 = vmatpush1.msra.mxu0 %v207
    %375 = vmatprep.subr.mxu0 0.0
    %376 = vmatpush1.msra.mxu0 %v208
    %377 = vmatprep.subr.mxu0 0.0
    %378 = vmatpush1.msra.mxu0 %v209
    %379 = vmatprep.subr.mxu0 0.0
    %380 = vmatpush1.msra.mxu0 %v210
    %381 = vmatprep.subr.mxu0 0.0
    %382 = vmatpush1.msra.mxu0 %v211
    %383 = vmatprep.subr.mxu0 0.0
    %384 = vmatpush1.msra.mxu0 %v212
    %385 = vmatprep.subr.mxu0 0.0
    %386 = vmatpush1.msra.mxu0 %v213
    %387 = vmatprep.subr.mxu0 0.0
    %388 = vmatpush1.msra.mxu0 %v214
    %389 = vmatprep.subr.mxu0 0.0
    %390 = vmatpush1.msra.mxu0 %v215
    %391 = vmatprep.subr.mxu0 0.0
    %392 = vmatpush1.msra.mxu0 %v216
    %393 = vmatprep.subr.mxu0 0.0
    %394 = vmatpush1.msra.mxu0 %v217
    %395 = vmatprep.subr.mxu0 0.0
    %396 = vmatpush1.msra.mxu0 %v218
    %397 = vmatprep.subr.mxu0 0.0
    %398 = vmatpush1.msra.mxu0 %v219
    %399 = vmatprep.subr.mxu0 0.0
    %400 = vmatpush1.msra.mxu0 %v220
    %401 = vmatprep.subr.mxu0 0.0
    %402 = vmatpush1.msra.mxu0 %v221
    %403 = vmatprep.subr.mxu0 0.0
    %404 = vmatpush1.msra.mxu0 0.0
    %405 = vmatprep.subr.mxu0 0.0
    %406 = vmatpush1.msra.mxu0 0.0
    %407 = vmatprep.subr.mxu0 0.0
    %408 = vmatpush1.msra.mxu0 0.0
    %409 = vmatprep.subr.mxu0 0.0
    %410 = vmatpush1.msra.mxu0 0.0
    %411 = vmatprep.subr.mxu0 0.0
    %412 = vmatpush1.msra.mxu0 0.0
    %413 = vmatprep.subr.mxu0 0.0
    %414 = vmatpush1.msra.mxu0 0.0
    %415 = vmatprep.subr.mxu0 0.0
    %416 = vmatpush1.msra.mxu0 0.0
    %417 = vmatprep.subr.mxu0 0.0
    %418 = vmatpush1.msra.mxu0 0.0
    %419 = vmatprep.subr.mxu0 0.0
    %420 = vmatpush1.msra.mxu0 0.0
    %421 = vmatprep.subr.mxu0 0.0
    %422 = vmatpush1.msra.mxu0 0.0
    %423 = vmatprep.subr.mxu0 0.0
    %424 = vmatpush1.msra.mxu0 0.0
    %425 = vmatprep.subr.mxu0 0.0
    %426 = vmatpush1.msra.mxu0 0.0
    %427 = vmatprep.subr.mxu0 0.0
    %428 = vmatpush1.msra.mxu0 0.0
    %429 = vmatprep.subr.mxu0 0.0
    %430 = vmatpush1.msra.mxu0 0.0
    %431 = vmatprep.subr.mxu0 0.0
    %432 = vmatpush1.msra.mxu0 0.0
    %433 = vmatprep.subr.mxu0 0.0
    %434 = vmatpush1.msra.mxu0 0.0
    %435 = vmatprep.mubr.f32.mxu0 0.0
    %436 = vmatmul.mubr.f32.gmra.mrb[0].mxu0 %v364
    %v437 = vpop.f32.mrb[0].mxu0
    %v438 = vadd.f32 %v370, %v437
    %v439 = vpop.f32.mrb[0].mxu0
    %440 = vdwg.mxu0
    %s441 = scalar_lea.vmem [#allocation4], 16
    %442 = vst [vmem:[%s441] sm:$0xff] %v438
    %s443 = scalar_lea.vmem [#allocation3], 24
    %v444 = vld [vmem:[%s443] sm:$0xff]
    %445 = vmatprep.subr.mxu0 0.0
    %446 = vmatpush1.msra.mxu0 %v206
    %447 = vmatprep.subr.mxu0 0.0
    %448 = vmatpush1.msra.mxu0 %v207
    %449 = vmatprep.subr.mxu0 0.0
    %450 = vmatpush1.msra.mxu0 %v208
    %451 = vmatprep.subr.mxu0 0.0
    %452 = vmatpush1.msra.mxu0 %v209
    %453 = vmatprep.subr.mxu0 0.0
    %454 = vmatpush1.msra.mxu0 %v210
    %455 = vmatprep.subr.mxu0 0.0
    %456 = vmatpush1.msra.mxu0 %v211
    %457 = vmatprep.subr.mxu0 0.0
    %458 = vmatpush1.msra.mxu0 %v212
    %459 = vmatprep.subr.mxu0 0.0
    %460 = vmatpush1.msra.mxu0 %v213
    %461 = vmatprep.subr.mxu0 0.0
    %462 = vmatpush1.msra.mxu0 %v214
    %463 = vmatprep.subr.mxu0 0.0
    %464 = vmatpush1.msra.mxu0 %v215
    %465 = vmatprep.subr.mxu0 0.0
    %466 = vmatpush1.msra.mxu0 %v216
    %467 = vmatprep.subr.mxu0 0.0
    %468 = vmatpush1.msra.mxu0 %v217
    %469 = vmatprep.subr.mxu0 0.0
    %470 = vmatpush1.msra.mxu0 %v218
    %471 = vmatprep.subr.mxu0 0.0
    %472 = vmatpush1.msra.mxu0 %v219
    %473 = vmatprep.subr.mxu0 0.0
    %474 = vmatpush1.msra.mxu0 %v220
    %475 = vmatprep.subr.mxu0 0.0
    %476 = vmatpush1.msra.mxu0 %v221
    %477 = vmatprep.subr.mxu0 0.0
    %478 = vmatpush1.msra.mxu0 0.0
    %479 = vmatprep.subr.mxu0 0.0
    %480 = vmatpush1.msra.mxu0 0.0
    %481 = vmatprep.subr.mxu0 0.0
    %482 = vmatpush1.msra.mxu0 0.0
    %483 = vmatprep.subr.mxu0 0.0
    %484 = vmatpush1.msra.mxu0 0.0
    %485 = vmatprep.subr.mxu0 0.0
    %486 = vmatpush1.msra.mxu0 0.0
    %487 = vmatprep.subr.mxu0 0.0
    %488 = vmatpush1.msra.mxu0 0.0
    %489 = vmatprep.subr.mxu0 0.0
    %490 = vmatpush1.msra.mxu0 0.0
    %491 = vmatprep.subr.mxu0 0.0
    %492 = vmatpush1.msra.mxu0 0.0
    %493 = vmatprep.subr.mxu0 0.0
    %494 = vmatpush1.msra.mxu0 0.0
    %495 = vmatprep.subr.mxu0 0.0
    %496 = vmatpush1.msra.mxu0 0.0
    %497 = vmatprep.subr.mxu0 0.0
    %498 = vmatpush1.msra.mxu0 0.0
    %499 = vmatprep.subr.mxu0 0.0
    %500 = vmatpush1.msra.mxu0 0.0
    %501 = vmatprep.subr.mxu0 0.0
    %502 = vmatpush1.msra.mxu0 0.0
    %503 = vmatprep.subr.mxu0 0.0
    %504 = vmatpush1.msra.mxu0 0.0
    %505 = vmatprep.subr.mxu0 0.0
    %506 = vmatpush1.msra.mxu0 0.0
    %507 = vmatprep.subr.mxu0 0.0
    %508 = vmatpush1.msra.mxu0 0.0
    %509 = vmatprep.mubr.f32.mxu0 0.0
    %510 = vmatmul.mubr.f32.gmra.mrb[0].mxu0 %v438
    %v511 = vpop.f32.mrb[0].mxu0
    %v512 = vadd.f32 %v444, %v511
    %v513 = vpop.f32.mrb[0].mxu0
    %514 = vdwg.mxu0
    %s515 = scalar_lea.vmem [#allocation4], 24
    %516 = vst [vmem:[%s515] sm:$0xff] %v512
    %s517 = scalar_lea.vmem [#allocation3], 32
    %v518 = vld [vmem:[%s517] sm:$0xff]
    %519 = vmatprep.subr.mxu0 0.0
    %520 = vmatpush1.msra.mxu0 %v206
    %521 = vmatprep.subr.mxu0 0.0
    %522 = vmatpush1.msra.mxu0 %v207
    %523 = vmatprep.subr.mxu0 0.0
    %524 = vmatpush1.msra.mxu0 %v208
    %525 = vmatprep.subr.mxu0 0.0
    %526 = vmatpush1.msra.mxu0 %v209
    %527 = vmatprep.subr.mxu0 0.0
    %528 = vmatpush1.msra.mxu0 %v210
    %529 = vmatprep.subr.mxu0 0.0
    %530 = vmatpush1.msra.mxu0 %v211
    %531 = vmatprep.subr.mxu0 0.0
    %532 = vmatpush1.msra.mxu0 %v212
    %533 = vmatprep.subr.mxu0 0.0
    %534 = vmatpush1.msra.mxu0 %v213
    %535 = vmatprep.subr.mxu0 0.0
    %536 = vmatpush1.msra.mxu0 %v214
    %537 = vmatprep.subr.mxu0 0.0
    %538 = vmatpush1.msra.mxu0 %v215
    %539 = vmatprep.subr.mxu0 0.0
    %540 = vmatpush1.msra.mxu0 %v216
    %541 = vmatprep.subr.mxu0 0.0
    %542 = vmatpush1.msra.mxu0 %v217
    %543 = vmatprep.subr.mxu0 0.0
    %544 = vmatpush1.msra.mxu0 %v218
    %545 = vmatprep.subr.mxu0 0.0
    %546 = vmatpush1.msra.mxu0 %v219
    %547 = vmatprep.subr.mxu0 0.0
    %548 = vmatpush1.msra.mxu0 %v220
    %549 = vmatprep.subr.mxu0 0.0
    %550 = vmatpush1.msra.mxu0 %v221
    %551 = vmatprep.subr.mxu0 0.0
    %552 = vmatpush1.msra.mxu0 0.0
    %553 = vmatprep.subr.mxu0 0.0
    %554 = vmatpush1.msra.mxu0 0.0
    %555 = vmatprep.subr.mxu0 0.0
    %556 = vmatpush1.msra.mxu0 0.0
    %557 = vmatprep.subr.mxu0 0.0
    %558 = vmatpush1.msra.mxu0 0.0
    %559 = vmatprep.subr.mxu0 0.0
    %560 = vmatpush1.msra.mxu0 0.0
    %561 = vmatprep.subr.mxu0 0.0
    %562 = vmatpush1.msra.mxu0 0.0
    %563 = vmatprep.subr.mxu0 0.0
    %564 = vmatpush1.msra.mxu0 0.0
    %565 = vmatprep.subr.mxu0 0.0
    %566 = vmatpush1.msra.mxu0 0.0
    %567 = vmatprep.subr.mxu0 0.0
    %568 = vmatpush1.msra.mxu0 0.0
    %569 = vmatprep.subr.mxu0 0.0
    %570 = vmatpush1.msra.mxu0 0.0
    %571 = vmatprep.subr.mxu0 0.0
    %572 = vmatpush1.msra.mxu0 0.0
    %573 = vmatprep.subr.mxu0 0.0
    %574 = vmatpush1.msra.mxu0 0.0
    %575 = vmatprep.subr.mxu0 0.0
    %576 = vmatpush1.msra.mxu0 0.0
    %577 = vmatprep.subr.mxu0 0.0
    %578 = vmatpush1.msra.mxu0 0.0
    %579 = vmatprep.subr.mxu0 0.0
    %580 = vmatpush1.msra.mxu0 0.0
    %581 = vmatprep.subr.mxu0 0.0
    %582 = vmatpush1.msra.mxu0 0.0
    %583 = vmatprep.mubr.f32.mxu0 0.0
    %584 = vmatmul.mubr.f32.gmra.mrb[0].mxu0 %v512
    %v585 = vpop.f32.mrb[0].mxu0
    %v586 = vadd.f32 %v518, %v585
    %v587 = vpop.f32.mrb[0].mxu0
    %588 = vdwg.mxu0
    %s589 = scalar_lea.vmem [#allocation4], 32
    %590 = vst [vmem:[%s589] sm:$0xff] %v586
    %s591 = scalar_lea.vmem [#allocation3], 40
    %v592 = vld [vmem:[%s591] sm:$0xff]
    %593 = vmatprep.subr.mxu0 0.0
    %594 = vmatpush1.msra.mxu0 %v206
    %595 = vmatprep.subr.mxu0 0.0
    %596 = vmatpush1.msra.mxu0 %v207
    %597 = vmatprep.subr.mxu0 0.0
    %598 = vmatpush1.msra.mxu0 %v208
    %599 = vmatprep.subr.mxu0 0.0
    %600 = vmatpush1.msra.mxu0 %v209
    %601 = vmatprep.subr.mxu0 0.0
    %602 = vmatpush1.msra.mxu0 %v210
    %603 = vmatprep.subr.mxu0 0.0
    %604 = vmatpush1.msra.mxu0 %v211
    %605 = vmatprep.subr.mxu0 0.0
    %606 = vmatpush1.msra.mxu0 %v212
    %607 = vmatprep.subr.mxu0 0.0
    %608 = vmatpush1.msra.mxu0 %v213
    %609 = vmatprep.subr.mxu0 0.0
    %610 = vmatpush1.msra.mxu0 %v214
    %611 = vmatprep.subr.mxu0 0.0
    %612 = vmatpush1.msra.mxu0 %v215
    %613 = vmatprep.subr.mxu0 0.0
    %614 = vmatpush1.msra.mxu0 %v216
    %615 = vmatprep.subr.mxu0 0.0
    %616 = vmatpush1.msra.mxu0 %v217
    %617 = vmatprep.subr.mxu0 0.0
    %618 = vmatpush1.msra.mxu0 %v218
    %619 = vmatprep.subr.mxu0 0.0
    %620 = vmatpush1.msra.mxu0 %v219
    %621 = vmatprep.subr.mxu0 0.0
    %622 = vmatpush1.msra.mxu0 %v220
    %623 = vmatprep.subr.mxu0 0.0
    %624 = vmatpush1.msra.mxu0 %v221
    %625 = vmatprep.subr.mxu0 0.0
    %626 = vmatpush1.msra.mxu0 0.0
    %627 = vmatprep.subr.mxu0 0.0
    %628 = vmatpush1.msra.mxu0 0.0
    %629 = vmatprep.subr.mxu0 0.0
    %630 = vmatpush1.msra.mxu0 0.0
    %631 = vmatprep.subr.mxu0 0.0
    %632 = vmatpush1.msra.mxu0 0.0
    %633 = vmatprep.subr.mxu0 0.0
    %634 = vmatpush1.msra.mxu0 0.0
    %635 = vmatprep.subr.mxu0 0.0
    %636 = vmatpush1.msra.mxu0 0.0
    %637 = vmatprep.subr.mxu0 0.0
    %638 = vmatpush1.msra.mxu0 0.0
    %639 = vmatprep.subr.mxu0 0.0
    %640 = vmatpush1.msra.mxu0 0.0
    %641 = vmatprep.subr.mxu0 0.0
    %642 = vmatpush1.msra.mxu0 0.0
    %643 = vmatprep.subr.mxu0 0.0
    %644 = vmatpush1.msra.mxu0 0.0
    %645 = vmatprep.subr.mxu0 0.0
    %646 = vmatpush1.msra.mxu0 0.0
    %647 = vmatprep.subr.mxu0 0.0
    %648 = vmatpush1.msra.mxu0 0.0
    %649 = vmatprep.subr.mxu0 0.0
    %650 = vmatpush1.msra.mxu0 0.0
    %651 = vmatprep.subr.mxu0 0.0
    %652 = vmatpush1.msra.mxu0 0.0
    %653 = vmatprep.subr.mxu0 0.0
    %654 = vmatpush1.msra.mxu0 0.0
    %655 = vmatprep.subr.mxu0 0.0
    %656 = vmatpush1.msra.mxu0 0.0
    %657 = vmatprep.mubr.f32.mxu0 0.0
    %658 = vmatmul.mubr.f32.gmra.mrb[0].mxu0 %v586
    %v659 = vpop.f32.mrb[0].mxu0
    %v660 = vadd.f32 %v592, %v659
    %v661 = vpop.f32.mrb[0].mxu0
    %662 = vdwg.mxu0
    %s663 = scalar_lea.vmem [#allocation4], 40
    %664 = vst [vmem:[%s663] sm:$0xff] %v660
    %s665 = scalar_lea.vmem [#allocation3], 48
    %v666 = vld [vmem:[%s665] sm:$0xff]
    %667 = vmatprep.subr.mxu0 0.0
    %668 = vmatpush1.msra.mxu0 %v206
    %669 = vmatprep.subr.mxu0 0.0
    %670 = vmatpush1.msra.mxu0 %v207
    %671 = vmatprep.subr.mxu0 0.0
    %672 = vmatpush1.msra.mxu0 %v208
    %673 = vmatprep.subr.mxu0 0.0
    %674 = vmatpush1.msra.mxu0 %v209
    %675 = vmatprep.subr.mxu0 0.0
    %676 = vmatpush1.msra.mxu0 %v210
    %677 = vmatprep.subr.mxu0 0.0
    %678 = vmatpush1.msra.mxu0 %v211
    %679 = vmatprep.subr.mxu0 0.0
    %680 = vmatpush1.msra.mxu0 %v212
    %681 = vmatprep.subr.mxu0 0.0
    %682 = vmatpush1.msra.mxu0 %v213
    %683 = vmatprep.subr.mxu0 0.0
    %684 = vmatpush1.msra.mxu0 %v214
    %685 = vmatprep.subr.mxu0 0.0
    %686 = vmatpush1.msra.mxu0 %v215
    %687 = vmatprep.subr.mxu0 0.0
    %688 = vmatpush1.msra.mxu0 %v216
    %689 = vmatprep.subr.mxu0 0.0
    %690 = vmatpush1.msra.mxu0 %v217
    %691 = vmatprep.subr.mxu0 0.0
    %692 = vmatpush1.msra.mxu0 %v218
    %693 = vmatprep.subr.mxu0 0.0
    %694 = vmatpush1.msra.mxu0 %v219
    %695 = vmatprep.subr.mxu0 0.0
    %696 = vmatpush1.msra.mxu0 %v220
    %697 = vmatprep.subr.mxu0 0.0
    %698 = vmatpush1.msra.mxu0 %v221
    %699 = vmatprep.subr.mxu0 0.0
    %700 = vmatpush1.msra.mxu0 0.0
    %701 = vmatprep.subr.mxu0 0.0
    %702 = vmatpush1.msra.mxu0 0.0
    %703 = vmatprep.subr.mxu0 0.0
    %704 = vmatpush1.msra.mxu0 0.0
    %705 = vmatprep.subr.mxu0 0.0
    %706 = vmatpush1.msra.mxu0 0.0
    %707 = vmatprep.subr.mxu0 0.0
    %708 = vmatpush1.msra.mxu0 0.0
    %709 = vmatprep.subr.mxu0 0.0
    %710 = vmatpush1.msra.mxu0 0.0
    %711 = vmatprep.subr.mxu0 0.0
    %712 = vmatpush1.msra.mxu0 0.0
    %713 = vmatprep.subr.mxu0 0.0
    %714 = vmatpush1.msra.mxu0 0.0
    %715 = vmatprep.subr.mxu0 0.0
    %716 = vmatpush1.msra.mxu0 0.0
    %717 = vmatprep.subr.mxu0 0.0
    %718 = vmatpush1.msra.mxu0 0.0
    %719 = vmatprep.subr.mxu0 0.0
    %720 = vmatpush1.msra.mxu0 0.0
    %721 = vmatprep.subr.mxu0 0.0
    %722 = vmatpush1.msra.mxu0 0.0
    %723 = vmatprep.subr.mxu0 0.0
    %724 = vmatpush1.msra.mxu0 0.0
    %725 = vmatprep.subr.mxu0 0.0
    %726 = vmatpush1.msra.mxu0 0.0
    %727 = vmatprep.subr.mxu0 0.0
    %728 = vmatpush1.msra.mxu0 0.0
    %729 = vmatprep.subr.mxu0 0.0
    %730 = vmatpush1.msra.mxu0 0.0
    %731 = vmatprep.mubr.f32.mxu0 0.0
    %732 = vmatmul.mubr.f32.gmra.mrb[0].mxu0 %v660
    %v733 = vpop.f32.mrb[0].mxu0
    %v734 = vadd.f32 %v666, %v733
    %v735 = vpop.f32.mrb[0].mxu0
    %736 = vdwg.mxu0
    %s737 = scalar_lea.vmem [#allocation4], 48
    %738 = vst [vmem:[%s737] sm:$0xff] %v734
    %s739 = scalar_lea.vmem [#allocation3], 56
    %v740 = vld [vmem:[%s739] sm:$0xff]
    %741 = vmatprep.subr.mxu0 0.0
    %742 = vmatpush1.msra.mxu0 %v206
    %743 = vmatprep.subr.mxu0 0.0
    %744 = vmatpush1.msra.mxu0 %v207
    %745 = vmatprep.subr.mxu0 0.0
    %746 = vmatpush1.msra.mxu0 %v208
    %747 = vmatprep.subr.mxu0 0.0
    %748 = vmatpush1.msra.mxu0 %v209
    %749 = vmatprep.subr.mxu0 0.0
    %750 = vmatpush1.msra.mxu0 %v210
    %751 = vmatprep.subr.mxu0 0.0
    %752 = vmatpush1.msra.mxu0 %v211
    %753 = vmatprep.subr.mxu0 0.0
    %754 = vmatpush1.msra.mxu0 %v212
    %755 = vmatprep.subr.mxu0 0.0
    %756 = vmatpush1.msra.mxu0 %v213
    %757 = vmatprep.subr.mxu0 0.0
    %758 = vmatpush1.msra.mxu0 %v214
    %759 = vmatprep.subr.mxu0 0.0
    %760 = vmatpush1.msra.mxu0 %v215
    %761 = vmatprep.subr.mxu0 0.0
    %762 = vmatpush1.msra.mxu0 %v216
    %763 = vmatprep.subr.mxu0 0.0
    %764 = vmatpush1.msra.mxu0 %v217
    %765 = vmatprep.subr.mxu0 0.0
    %766 = vmatpush1.msra.mxu0 %v218
    %767 = vmatprep.subr.mxu0 0.0
    %768 = vmatpush1.msra.mxu0 %v219
    %769 = vmatprep.subr.mxu0 0.0
    %770 = vmatpush1.msra.mxu0 %v220
    %771 = vmatprep.subr.mxu0 0.0
    %772 = vmatpush1.msra.mxu0 %v221
    %773 = vmatprep.subr.mxu0 0.0
    %774 = vmatpush1.msra.mxu0 0.0
    %775 = vmatprep.subr.mxu0 0.0
    %776 = vmatpush1.msra.mxu0 0.0
    %777 = vmatprep.subr.mxu0 0.0
    %778 = vmatpush1.msra.mxu0 0.0
    %779 = vmatprep.subr.mxu0 0.0
    %780 = vmatpush1.msra.mxu0 0.0
    %781 = vmatprep.subr.mxu0 0.0
    %782 = vmatpush1.msra.mxu0 0.0
    %783 = vmatprep.subr.mxu0 0.0
    %784 = vmatpush1.msra.mxu0 0.0
    %785 = vmatprep.subr.mxu0 0.0
    %786 = vmatpush1.msra.mxu0 0.0
    %787 = vmatprep.subr.mxu0 0.0
    %788 = vmatpush1.msra.mxu0 0.0
    %789 = vmatprep.subr.mxu0 0.0
    %790 = vmatpush1.msra.mxu0 0.0
    %791 = vmatprep.subr.mxu0 0.0
    %792 = vmatpush1.msra.mxu0 0.0
    %793 = vmatprep.subr.mxu0 0.0
    %794 = vmatpush1.msra.mxu0 0.0
    %795 = vmatprep.subr.mxu0 0.0
    %796 = vmatpush1.msra.mxu0 0.0
    %797 = vmatprep.subr.mxu0 0.0
    %798 = vmatpush1.msra.mxu0 0.0
    %799 = vmatprep.subr.mxu0 0.0
    %800 = vmatpush1.msra.mxu0 0.0
    %801 = vmatprep.subr.mxu0 0.0
    %802 = vmatpush1.msra.mxu0 0.0
    %803 = vmatprep.subr.mxu0 0.0
    %804 = vmatpush1.msra.mxu0 0.0
    %805 = vmatprep.mubr.f32.mxu0 0.0
    %806 = vmatmul.mubr.f32.gmra.mrb[0].mxu0 %v734
    %v807 = vpop.f32.mrb[0].mxu0
    %v808 = vadd.f32 %v740, %v807
    %v809 = vpop.f32.mrb[0].mxu0
    %810 = vdwg.mxu0
    %s811 = scalar_lea.vmem [#allocation4], 56
    %812 = vst [vmem:[%s811] sm:$0xff] %v808
    %813 = vst [vmem:[#allocation2] sm:$0xff] %v808
    %v814 = vld [vmem:[#allocation5] sm:$0xff]
    %v815 = vld [vmem:[#allocation5 + $0x8] sm:$0xff]
    %v816 = vld [vmem:[#allocation5 + $0x10] sm:$0xff]
    %v817 = vld [vmem:[#allocation5 + $0x18] sm:$0xff]
    %v818 = vld [vmem:[#allocation5 + $0x20] sm:$0xff]
    %v819 = vld [vmem:[#allocation5 + $0x28] sm:$0xff]
    %v820 = vld [vmem:[#allocation5 + $0x30] sm:$0xff]
    %v821 = vld [vmem:[#allocation5 + $0x38] sm:$0xff]
    %v822 = vld [vmem:[%s5] sm:$0xff]
    %v823 = vld [vmem:[%s6] sm:$0x1]
    %v825 = vlaneseq
    %v826 = vshrl.u32 %v825, 7
    %v827 = vsub.s32 0, %v826
    %v828 = vrot.slane %v823, %v827
    %v831 = vsel %vm68, %v814, 0
    %v834 = vsel %vm68, %v815, 0
    %v837 = vsel %vm68, %v816, 0
    %v840 = vsel %vm68, %v817, 0
    %v843 = vsel %vm68, %v818, 0
    %v846 = vsel %vm68, %v819, 0
    %v849 = vsel %vm68, %v820, 0
    %v852 = vsel %vm68, %v821, 0
    %854 = vmatprep.subr.mxu0 0.0
    %855 = vmatpush1.msra.mxu0 %v822
    %856 = vmatprep.subr.mxu0 0.0
    %857 = vmatpush1.msra.mxu0 0.0
    %858 = vmatprep.subr.mxu0 0.0
    %859 = vmatpush1.msra.mxu0 0.0
    %860 = vmatprep.subr.mxu0 0.0
    %861 = vmatpush1.msra.mxu0 0.0
    %862 = vmatprep.subr.mxu0 0.0
    %863 = vmatpush1.msra.mxu0 0.0
    %864 = vmatprep.subr.mxu0 0.0
    %865 = vmatpush1.msra.mxu0 0.0
    %866 = vmatprep.subr.mxu0 0.0
    %867 = vmatpush1.msra.mxu0 0.0
    %868 = vmatprep.subr.mxu0 0.0
    %869 = vmatpush1.msra.mxu0 0.0
    %870 = vmatprep.subr.mxu0 0.0
    %871 = vmatpush1.msra.mxu0 0.0
    %872 = vmatprep.subr.mxu0 0.0
    %873 = vmatpush1.msra.mxu0 0.0
    %874 = vmatprep.subr.mxu0 0.0
    %875 = vmatpush1.msra.mxu0 0.0
    %876 = vmatprep.subr.mxu0 0.0
    %877 = vmatpush1.msra.mxu0 0.0
    %878 = vmatprep.subr.mxu0 0.0
    %879 = vmatpush1.msra.mxu0 0.0
    %880 = vmatprep.subr.mxu0 0.0
    %881 = vmatpush1.msra.mxu0 0.0
    %882 = vmatprep.subr.mxu0 0.0
    %883 = vmatpush1.msra.mxu0 0.0
    %884 = vmatprep.subr.mxu0 0.0
    %885 = vmatpush1.msra.mxu0 0.0
    %886 = vmatprep.subr.mxu0 0.0
    %887 = vmatpush1.msra.mxu0 0.0
    %888 = vmatprep.subr.mxu0 0.0
    %889 = vmatpush1.msra.mxu0 0.0
    %890 = vmatprep.subr.mxu0 0.0
    %891 = vmatpush1.msra.mxu0 0.0
    %892 = vmatprep.subr.mxu0 0.0
    %893 = vmatpush1.msra.mxu0 0.0
    %894 = vmatprep.subr.mxu0 0.0
    %895 = vmatpush1.msra.mxu0 0.0
    %896 = vmatprep.subr.mxu0 0.0
    %897 = vmatpush1.msra.mxu0 0.0
    %898 = vmatprep.subr.mxu0 0.0
    %899 = vmatpush1.msra.mxu0 0.0
    %900 = vmatprep.subr.mxu0 0.0
    %901 = vmatpush1.msra.mxu0 0.0
    %902 = vmatprep.subr.mxu0 0.0
    %903 = vmatpush1.msra.mxu0 0.0
    %904 = vmatprep.subr.mxu0 0.0
    %905 = vmatpush1.msra.mxu0 0.0
    %906 = vmatprep.subr.mxu0 0.0
    %907 = vmatpush1.msra.mxu0 0.0
    %908 = vmatprep.subr.mxu0 0.0
    %909 = vmatpush1.msra.mxu0 0.0
    %910 = vmatprep.subr.mxu0 0.0
    %911 = vmatpush1.msra.mxu0 0.0
    %912 = vmatprep.subr.mxu0 0.0
    %913 = vmatpush1.msra.mxu0 0.0
    %914 = vmatprep.subr.mxu0 0.0
    %915 = vmatpush1.msra.mxu0 0.0
    %916 = vmatprep.subr.mxu0 0.0
    %917 = vmatpush1.msra.mxu0 0.0
    %918 = vmatprep.mubr.f32.mxu0 0.0
    %919 = vmatmul.mubr.f32.gmra.mrb[0].mxu0 %v831
    %v920 = vpop.f32.mrb[0].mxu0
    %v921 = vadd.f32 %v828, %v920
    %v922 = vpop.f32.mrb[0].mxu0
    %923 = vmatprep.mubr.f32.mxu0 0.0
    %924 = vmatmul.mubr.f32.gmra.mrb[0].mxu0 %v834
    %v925 = vpop.f32.mrb[0].mxu0
    %v926 = vadd.f32 %v828, %v925
    %v927 = vpop.f32.mrb[0].mxu0
    %928 = vmatprep.mubr.f32.mxu0 0.0
    %929 = vmatmul.mubr.f32.gmra.mrb[0].mxu0 %v837
    %v930 = vpop.f32.mrb[0].mxu0
    %v931 = vadd.f32 %v828, %v930
    %v932 = vpop.f32.mrb[0].mxu0
    %933 = vmatprep.mubr.f32.mxu0 0.0
    %934 = vmatmul.mubr.f32.gmra.mrb[0].mxu0 %v840
    %v935 = vpop.f32.mrb[0].mxu0
    %v936 = vadd.f32 %v828, %v935
    %v937 = vpop.f32.mrb[0].mxu0
    %938 = vmatprep.mubr.f32.mxu0 0.0
    %939 = vmatmul.mubr.f32.gmra.mrb[0].mxu0 %v843
    %v940 = vpop.f32.mrb[0].mxu0
    %v941 = vadd.f32 %v828, %v940
    %v942 = vpop.f32.mrb[0].mxu0
    %943 = vmatprep.mubr.f32.mxu0 0.0
    %944 = vmatmul.mubr.f32.gmra.mrb[0].mxu0 %v846
    %v945 = vpop.f32.mrb[0].mxu0
    %v946 = vadd.f32 %v828, %v945
    %v947 = vpop.f32.mrb[0].mxu0
    %948 = vmatprep.mubr.f32.mxu0 0.0
    %949 = vmatmul.mubr.f32.gmra.mrb[0].mxu0 %v849
    %v950 = vpop.f32.mrb[0].mxu0
    %v951 = vadd.f32 %v828, %v950
    %v952 = vpop.f32.mrb[0].mxu0
    %953 = vmatprep.mubr.f32.mxu0 0.0
    %954 = vmatmul.mubr.f32.gmra.mrb[0].mxu0 %v852
    %v955 = vpop.f32.mrb[0].mxu0
    %v956 = vadd.f32 %v828, %v955
    %v957 = vpop.f32.mrb[0].mxu0
    %958 = vdwg.mxu0
    %v959 = vld [vmem:[#allocation4] sm:$0xff]
    %v960 = vld [vmem:[#allocation4 + $0x8] sm:$0xff]
    %v961 = vld [vmem:[#allocation4 + $0x10] sm:$0xff]
    %v962 = vld [vmem:[#allocation4 + $0x18] sm:$0xff]
    %v963 = vld [vmem:[#allocation4 + $0x20] sm:$0xff]
    %v964 = vld [vmem:[#allocation4 + $0x28] sm:$0xff]
    %v965 = vld [vmem:[#allocation4 + $0x30] sm:$0xff]
    %v966 = vld [vmem:[#allocation4 + $0x38] sm:$0xff]
    %v967 = vld [vmem:[%s4] sm:$0xff]
    %v968 = vld [vmem:[%s4 + $0x8] sm:$0xff]
    %v969 = vld [vmem:[%s4 + $0x10] sm:$0xff]
    %v970 = vld [vmem:[%s4 + $0x18] sm:$0xff]
    %v971 = vld [vmem:[%s4 + $0x20] sm:$0xff]
    %v972 = vld [vmem:[%s4 + $0x28] sm:$0xff]
    %v973 = vld [vmem:[%s4 + $0x30] sm:$0xff]
    %v974 = vld [vmem:[%s4 + $0x38] sm:$0xff]
    %v975 = vld [vmem:[%s4 + $0x40] sm:$0xff]
    %v976 = vld [vmem:[%s4 + $0x48] sm:$0xff]
    %v977 = vld [vmem:[%s4 + $0x50] sm:$0xff]
    %v978 = vld [vmem:[%s4 + $0x58] sm:$0xff]
    %v979 = vld [vmem:[%s4 + $0x60] sm:$0xff]
    %v980 = vld [vmem:[%s4 + $0x68] sm:$0xff]
    %v981 = vld [vmem:[%s4 + $0x70] sm:$0xff]
    %v982 = vld [vmem:[%s4 + $0x78] sm:$0xff]
    %983 = vmatprep.subr.mxu0 0.0
    %984 = vmatpush1.msra.mxu0 %v967
    %985 = vmatprep.subr.mxu0 0.0
    %986 = vmatpush1.msra.mxu0 %v968
    %987 = vmatprep.subr.mxu0 0.0
    %988 = vmatpush1.msra.mxu0 %v969
    %989 = vmatprep.subr.mxu0 0.0
    %990 = vmatpush1.msra.mxu0 %v970
    %991 = vmatprep.subr.mxu0 0.0
    %992 = vmatpush1.msra.mxu0 %v971
    %993 = vmatprep.subr.mxu0 0.0
    %994 = vmatpush1.msra.mxu0 %v972
    %995 = vmatprep.subr.mxu0 0.0
    %996 = vmatpush1.msra.mxu0 %v973
    %997 = vmatprep.subr.mxu0 0.0
    %998 = vmatpush1.msra.mxu0 %v974
    %999 = vmatprep.subr.mxu0 0.0
    %1000 = vmatpush1.msra.mxu0 %v975
    %1001 = vmatprep.subr.mxu0 0.0
    %1002 = vmatpush1.msra.mxu0 %v976
    %1003 = vmatprep.subr.mxu0 0.0
    %1004 = vmatpush1.msra.mxu0 %v977
    %1005 = vmatprep.subr.mxu0 0.0
    %1006 = vmatpush1.msra.mxu0 %v978
    %1007 = vmatprep.subr.mxu0 0.0
    %1008 = vmatpush1.msra.mxu0 %v979
    %1009 = vmatprep.subr.mxu0 0.0
    %1010 = vmatpush1.msra.mxu0 %v980
    %1011 = vmatprep.subr.mxu0 0.0
    %1012 = vmatpush1.msra.mxu0 %v981
    %1013 = vmatprep.subr.mxu0 0.0
    %1014 = vmatpush1.msra.mxu0 %v982
    %1015 = vmatprep.subr.mxu0 0.0
    %1016 = vmatpush1.msra.mxu0 0.0
    %1017 = vmatprep.subr.mxu0 0.0
    %1018 = vmatpush1.msra.mxu0 0.0
    %1019 = vmatprep.subr.mxu0 0.0
    %1020 = vmatpush1.msra.mxu0 0.0
    %1021 = vmatprep.subr.mxu0 0.0
    %1022 = vmatpush1.msra.mxu0 0.0
    %1023 = vmatprep.subr.mxu0 0.0
    %1024 = vmatpush1.msra.mxu0 0.0
    %1025 = vmatprep.subr.mxu0 0.0
    %1026 = vmatpush1.msra.mxu0 0.0
    %1027 = vmatprep.subr.mxu0 0.0
    %1028 = vmatpush1.msra.mxu0 0.0
    %1029 = vmatprep.subr.mxu0 0.0
    %1030 = vmatpush1.msra.mxu0 0.0
    %1031 = vmatprep.subr.mxu0 0.0
    %1032 = vmatpush1.msra.mxu0 0.0
    %1033 = vmatprep.subr.mxu0 0.0
    %1034 = vmatpush1.msra.mxu0 0.0
    %1035 = vmatprep.subr.mxu0 0.0
    %1036 = vmatpush1.msra.mxu0 0.0
    %1037 = vmatprep.subr.mxu0 0.0
    %1038 = vmatpush1.msra.mxu0 0.0
    %1039 = vmatprep.subr.mxu0 0.0
    %1040 = vmatpush1.msra.mxu0 0.0
    %1041 = vmatprep.subr.mxu0 0.0
    %1042 = vmatpush1.msra.mxu0 0.0
    %1043 = vmatprep.subr.mxu0 0.0
    %1044 = vmatpush1.msra.mxu0 0.0
    %1045 = vmatprep.subr.mxu0 0.0
    %1046 = vmatpush1.msra.mxu0 0.0
    %1047 = vmatprep.mubr.f32.mxu0 0.0
    %1048 = vmatmul.mubr.f32.gmra.mrb[0].mxu0 %v959
    %v1049 = vpop.f32.mrb[0].mxu0
    %v1050 = vadd.f32 %v921, %v1049
    %v1051 = vpop.f32.mrb[0].mxu0
    %1052 = vmatprep.mubr.f32.mxu0 0.0
    %1053 = vmatmul.mubr.f32.gmra.mrb[0].mxu0 %v960
    %v1054 = vpop.f32.mrb[0].mxu0
    %v1055 = vadd.f32 %v926, %v1054
    %v1056 = vpop.f32.mrb[0].mxu0
    %1057 = vmatprep.mubr.f32.mxu0 0.0
    %1058 = vmatmul.mubr.f32.gmra.mrb[0].mxu0 %v961
    %v1059 = vpop.f32.mrb[0].mxu0
    %v1060 = vadd.f32 %v931, %v1059
    %v1061 = vpop.f32.mrb[0].mxu0
    %1062 = vmatprep.mubr.f32.mxu0 0.0
    %1063 = vmatmul.mubr.f32.gmra.mrb[0].mxu0 %v962
    %v1064 = vpop.f32.mrb[0].mxu0
    %v1065 = vadd.f32 %v936, %v1064
    %v1066 = vpop.f32.mrb[0].mxu0
    %1067 = vmatprep.mubr.f32.mxu0 0.0
    %1068 = vmatmul.mubr.f32.gmra.mrb[0].mxu0 %v963
    %v1069 = vpop.f32.mrb[0].mxu0
    %v1070 = vadd.f32 %v941, %v1069
    %v1071 = vpop.f32.mrb[0].mxu0
    %1072 = vmatprep.mubr.f32.mxu0 0.0
    %1073 = vmatmul.mubr.f32.gmra.mrb[0].mxu0 %v964
    %v1074 = vpop.f32.mrb[0].mxu0
    %v1075 = vadd.f32 %v946, %v1074
    %v1076 = vpop.f32.mrb[0].mxu0
    %1077 = vmatprep.mubr.f32.mxu0 0.0
    %1078 = vmatmul.mubr.f32.gmra.mrb[0].mxu0 %v965
    %v1079 = vpop.f32.mrb[0].mxu0
    %v1080 = vadd.f32 %v951, %v1079
    %v1081 = vpop.f32.mrb[0].mxu0
    %1082 = vmatprep.mubr.f32.mxu0 0.0
    %1083 = vmatmul.mubr.f32.gmra.mrb[0].mxu0 %v966
    %v1084 = vpop.f32.mrb[0].mxu0
    %v1085 = vadd.f32 %v956, %v1084
    %v1086 = vpop.f32.mrb[0].mxu0
    %1087 = vdwg.mxu0
    %1088 = vst.msk [vmem:[#allocation10] sm:$0xff] %vm68, %v1050
    %1089 = vst.msk [vmem:[#allocation10 + $0x8] sm:$0xff] %vm68, %v1055
    %1090 = vst.msk [vmem:[#allocation10 + $0x10] sm:$0xff] %vm68, %v1060
    %1091 = vst.msk [vmem:[#allocation10 + $0x18] sm:$0xff] %vm68, %v1065
    %1092 = vst.msk [vmem:[#allocation10 + $0x20] sm:$0xff] %vm68, %v1070
    %1093 = vst.msk [vmem:[#allocation10 + $0x28] sm:$0xff] %vm68, %v1075
    %1094 = vst.msk [vmem:[#allocation10 + $0x30] sm:$0xff] %vm68, %v1080
    %1095 = vst.msk [vmem:[#allocation10 + $0x38] sm:$0xff] %vm68, %v1085
    // Predicated region
    $region42: #{tpu_custom_call.1} parent=1 // pred_check
      _
    $region43: #{tpu_custom_call.1} parent=1 // pred_check_branch
      %1097 = sbr.rel (0) target = $region45
    $region44: #{tpu_custom_call.1} parent=1 // pred_region
      %s1099 = ssub.s32 1024, 1024
      %1100 = vsyncadd [#allocation7], %s1099
      %s1101 = sshll.u32 [#allocation10], 4
      %s1102 = int_to_ptr.vmem [resolvable:$true] %s1101
      %1107 = dma.vmem_to_hbm [thread:$0]  %s1102, 1024, %s7, [#allocation7], 128, 128, 8
    $region45: #{tpu_custom_call.1} parent=1 // pred_fallthru
      _
    // Predicated region
    $region46: #{tpu_custom_call.1} parent=1 // pred_check
      _
    $region47: #{tpu_custom_call.1} parent=1 // pred_check_branch
      %1109 = sbr.rel (0) target = $region49
    $region48: #{tpu_custom_call.1} parent=1 // pred_region
      %1110 = dma.done [#allocation7], 1024
    $region49: #{tpu_custom_call.1} parent=1 // pred_fallthru
      _
    %1111 = vsyncpa [#allocation6], 1
    %1112 = vsyncpa [#allocation9], 1
    %1113 = vsyncpa [#allocation7], 1

</llo_original>
